<compile_context>
chip_gen: v7x
topology: tpu7x:2x2x1
jax: 0.10.0
libtpu: 0.0.40
codegen_flags: <defaults>
</compile_context>

<pallas_src>
import functools

import jax
import jax.numpy as jnp
from jax.experimental import pallas as pl
from jax.experimental.pallas import tpu as pltpu


def _round_up(n, m):
    return ((n + m - 1) // m) * m


def _pad_gate_axis(w, h, g):
    """Re-lay the last axis (4*h, PyTorch gate order i,f,g,o) into 4 slabs of width g."""
    if h == g:
        return w
    pad = [(0, 0)] * (w.ndim - 1) + [(0, g - h)]
    parts = [jnp.pad(w[..., k * h:(k + 1) * h], pad) for k in range(4)]
    return jnp.concatenate(parts, axis=-1)


def prepare_weights(params):
    """One-time weight prep: fold input Linear into the LSTM, pad gates, cast to bf16.

    Gate stride G: one 128-lane slab per gate when H is large; when 4*H <= 128 all four
    gates are packed into a single slab (G = H) -- the small-H fast path.
    Padded gate columns have zero weights/bias, so padded c/h lanes stay exactly 0.
    """
    f32, bf16 = jnp.float32, jnp.bfloat16
    H = params["w_hh"].shape[0]
    G = H if 4 * H <= 128 else _round_up(H, 128)

    # Fold: x@W_in@W_ih + (b_in@W_ih + b_gates) + h@W_hh   (exact in f32).
    w_x = params["w_in"].astype(f32) @ params["w_ih"].astype(f32)           # (F_in, 4H)
    b_x = params["b_in"].astype(f32) @ params["w_ih"].astype(f32) \
        + params["b_gates"].astype(f32)                                     # (1, 4H)

    w_x = _pad_gate_axis(w_x, H, G).astype(bf16)                            # (F_in, 4G)
    b_x = _pad_gate_axis(b_x, H, G).astype(f32)                             # (1, 4G)
    w_hh = jnp.pad(_pad_gate_axis(params["w_hh"].astype(f32), H, G),
                   ((0, G - H), (0, 0))).astype(bf16)                       # (G, 4G)
    w_fc = jnp.pad(params["w_fc"].astype(f32), ((0, G - H), (0, 0))).astype(bf16)  # (G, O)
    b_fc = params["b_fc"].astype(f32)                                       # (1, O)
    return {"w_x": w_x, "b_x": b_x, "w_hh": w_hh, "w_fc": w_fc, "b_fc": b_fc}


def lstm_seq_kernel(x_ref, w_x_ref, w_hh_ref, b_x_ref, w_fc_ref, b_fc_ref,
                    out_ref, h_sc, c_sc, gx_sc, *, t_chunk, seq_len):
    t = pl.program_id(1)                       # time-chunk axis (serial, "arbitrary")

    @pl.when(t == 0)
    def _init():                               # fresh state per batch shard
        h_sc[...] = jnp.zeros_like(h_sc)
        c_sc[...] = jnp.zeros_like(c_sc)

    bp, g = h_sc.shape                         # padded per-shard batch, gate stride

    # Hoisted input projection for the whole chunk: one batched MXU matmul
    # (W_in @ W_ih folded in the wrapper), kept in VMEM scratch.
    gx = (jnp.dot(x_ref[...], w_x_ref[...], preferred_element_type=jnp.float32)
          + b_x_ref[...])                                        # (t_chunk*bp, 4*g) f32
    gx_sc[...] = gx.astype(gx_sc.dtype)

    w_hh = w_hh_ref[...]                       # (g, 4*g) bf16, resident across the chunk

    def sigm(z):                               # one EUP tanh instead of exp + reciprocal
        return 0.5 * jnp.tanh(0.5 * z) + 0.5

    mask_tail = (seq_len % t_chunk) != 0       # static: only mask if T was padded

    def body(j, carry):
        h, c = carry
        row = pl.multiple_of(j * bp, bp)
        # Only h @ W_hh remains on the serial critical path.
        gates = gx_sc[pl.ds(row, bp), :].astype(jnp.float32) + jnp.dot(
            h.astype(jnp.bfloat16), w_hh, preferred_element_type=jnp.float32)
        i_g = sigm(gates[:, 0 * g:1 * g])
        f_g = sigm(gates[:, 1 * g:2 * g])
        g_g = jnp.tanh(gates[:, 2 * g:3 * g])
        o_g = sigm(gates[:, 3 * g:4 * g])
        c_new = f_g * c + i_g * g_g
        h_new = o_g * jnp.tanh(c_new)
        if mask_tail:                          # padded (beyond seq_len) timesteps: keep state
            valid = (t * t_chunk + j) < seq_len
            h_new = jnp.where(valid, h_new, h)
            c_new = jnp.where(valid, c_new, c)
        return h_new, c_new

    h_fin, c_fin = jax.lax.fori_loop(0, t_chunk, body, (h_sc[...], c_sc[...]),
                                     unroll=True)
    h_sc[...] = h_fin
    c_sc[...] = c_fin

    @pl.when(t == pl.num_programs(1) - 1)
    def _finalize():
        pred = (jnp.dot(h_fin.astype(jnp.bfloat16), w_fc_ref[...],
                        preferred_element_type=jnp.float32) + b_fc_ref[...])
        out_ref[...] = pred.astype(out_ref.dtype)


@functools.partial(jax.jit, static_argnames=("t_chunk", "batch_shards", "gx_dtype"))
def lstm_seq_forward(x, prep, *, t_chunk=16, batch_shards=1, gx_dtype=None):
    """x: (B, T, input_size) float32 (PyTorch batch_first). prep: prepare_weights(...)."""
    B, T, F_in = x.shape
    G = prep["w_hh"].shape[0]
    O = prep["w_fc"].shape[1]
    assert prep["w_x"].shape[0] == F_in

    bp = _round_up(-(-B // batch_shards), 8)   # per-shard padded batch (>= 8 sublanes)
    Bp_total = batch_shards * bp
    t_chunk = max(1, min(t_chunk, T))
    T_pad = _round_up(T, t_chunk)
    n_chunks = T_pad // t_chunk
    rows = t_chunk * bp

    if gx_dtype is None:                       # size-derived (bf16 halves gx on big configs)
        gx_dtype = jnp.float32 if rows * 4 * G * 4 <= (16 << 20) else jnp.bfloat16

    # Time-major, shard-major, batch-padded, bf16 x (transpose fuses with the cast).
    bf16 = jnp.bfloat16
    x_p = jnp.pad(x, ((0, Bp_total - B), (0, 0), (0, 0)))            # (Bp_total, T, F)
    x_tm = jnp.transpose(x_p, (1, 0, 2))                             # (T, Bp_total, F)
    x_tm = jnp.pad(x_tm, ((0, T_pad - T), (0, 0), (0, 0)))           # (T_pad, Bp_total, F)
    x_tm = x_tm.reshape(T_pad, batch_shards, bp, F_in).transpose(1, 0, 2, 3)
    x_tm = x_tm.reshape(batch_shards, T_pad * bp, F_in).astype(bf16)

    # Size-derived VMEM budget (weights still double-buffered by the pipeline; see TODO).
    itemsize = jnp.dtype(gx_dtype).itemsize
    weight_bytes = ((prep["w_x"].size + prep["w_hh"].size + prep["w_fc"].size) * 2
                    + (prep["b_x"].size + prep["b_fc"].size) * 4)
    est = (2 * rows * F_in * 2            # x chunk (bf16, double-buffered)
           + 2 * weight_bytes             # weights + biases (double-buffered)
           + rows * 4 * G * itemsize      # gx scratch
           + 2 * bp * G * 4               # h/c scratch
           + 2 * bp * O * 4)              # output block
    vmem_limit = int(min(100 << 20, max(32 << 20, 2 * est)))

    kernel = functools.partial(lstm_seq_kernel, t_chunk=t_chunk, seq_len=T)
    const = lambda s, t: (0, 0)           # weights: same resident block every grid step

    out = pl.pallas_call(
        kernel,
        out_shape=jax.ShapeDtypeStruct((batch_shards, bp, O), jnp.float32),
        grid_spec=pltpu.PrefetchScalarGridSpec(
            num_scalar_prefetch=0,
            grid=(batch_shards, n_chunks),
            in_specs=[
                pl.BlockSpec((None, rows, F_in), lambda s, t: (s, t, 0)),  # x chunk
                pl.BlockSpec(prep["w_x"].shape, const),                    # W_in@W_ih (bf16)
                pl.BlockSpec(prep["w_hh"].shape, const),                   # W_hh (bf16)
                pl.BlockSpec(prep["b_x"].shape, const),                    # fused gate bias
                pl.BlockSpec(prep["w_fc"].shape, const),                   # W_fc (bf16)
                pl.BlockSpec(prep["b_fc"].shape, const),                   # b_fc
            ],
            out_specs=pl.BlockSpec((None, bp, O), lambda s, t: (s, 0, 0)),
            scratch_shapes=[
                pltpu.VMEM((bp, G), jnp.float32),          # h state (carried over t)
                pltpu.VMEM((bp, G), jnp.float32),          # c state (carried over t)
                pltpu.VMEM((rows, 4 * G), gx_dtype),       # chunk gate pre-activations
            ],
        ),
        compiler_params=pltpu.CompilerParams(
            # Batch shards are independent (megacore on v7x); time is strictly serial.
            dimension_semantics=("parallel", "arbitrary"),
            vmem_limit_bytes=vmem_limit,
        ),
    )(x_tm, prep["w_x"], prep["w_hh"], prep["b_x"], prep["w_fc"], prep["b_fc"])
    return out.reshape(batch_shards * bp, O)[:B]


def make_params(key, input_size, lstm_input, hidden_size, output_size):
    ks = jax.random.split(key, 8)
    scale = 0.1
    # Stored pre-transposed so the math is x @ W (+ b) directly.
    return {
        "w_in": scale * jax.random.normal(ks[0], (input_size, lstm_input), jnp.float32),
        "b_in": scale * jax.random.normal(ks[1], (1, lstm_input), jnp.float32),
        "w_ih": scale * jax.random.normal(ks[2], (lstm_input, 4 * hidden_size), jnp.float32),
        "w_hh": scale * jax.random.normal(ks[3], (hidden_size, 4 * hidden_size), jnp.float32),
        "b_gates": scale * (jax.random.normal(ks[4], (1, 4 * hidden_size), jnp.float32)
                            + jax.random.normal(ks[5], (1, 4 * hidden_size), jnp.float32)),
        "w_fc": scale * jax.random.normal(ks[6], (hidden_size, output_size), jnp.float32),
        "b_fc": scale * jax.random.normal(ks[7], (1, output_size), jnp.float32),
    }


def reference_forward(x, params):
    """Pure-JAX f32 reference matching PyTorch LSTMSeq.forward semantics."""
    B, T, _ = x.shape
    H = params["w_hh"].shape[0]
    u = x @ params["w_in"] + params["b_in"]  # (B, T, L)

    def step(carry, u_t):
        h, c = carry
        gates = u_t @ params["w_ih"] + h @ params["w_hh"] + params["b_gates"]
        i = jax.nn.sigmoid(gates[:, 0 * H:1 * H])
        f = jax.nn.sigmoid(gates[:, 1 * H:2 * H])
        g = jnp.tanh(gates[:, 2 * H:3 * H])
        o = jax.nn.sigmoid(gates[:, 3 * H:4 * H])
        c = f * c + i * g
        h = o * jnp.tanh(c)
        return (h, c), None

    h0 = jnp.zeros((B, H), jnp.float32)
    (h_last, _), _ = jax.lax.scan(step, (h0, h0), jnp.transpose(u, (1, 0, 2)))
    return h_last @ params["w_fc"] + params["b_fc"]


if __name__ == "__main__":
    key = jax.random.PRNGKey(0)
    kx, kp, kx2 = jax.random.split(key, 3)

    # Small shapes consistent with the module's forward: x is (batch, seq, input_size).
    input_size, lstm_input, hidden_size, output_size = 16, 32, 32, 4
    params = make_params(kp, input_size, lstm_input, hidden_size, output_size)
    prep = prepare_weights(params)   # padded/folded/cast weights built once

    # Test 1: baseline small case (single batch shard).
    B, T = 2, 16
    x = jax.random.normal(kx, (B, T, input_size), jnp.float32)
    pred = jax.block_until_ready(lstm_seq_forward(x, prep, t_chunk=16))
    ref = reference_forward(x, params)
    assert pred.shape == (B, output_size)
    # bf16 MXU operands vs f32 reference: loose tolerance.
    assert jnp.allclose(pred, ref, atol=2e-2, rtol=2e-2), float(jnp.max(jnp.abs(pred - ref)))

    # Test 2: exercises the parallel batch-shard axis (v7x two-TensorCore path), the
    # masked non-divisible time tail (T=20, t_chunk=16), and the bf16 gx scratch option.
    B2, T2 = 10, 20
    x2 = jax.random.normal(kx2, (B2, T2, input_size), jnp.float32)
    pred2 = jax.block_until_ready(
        lstm_seq_forward(x2, prep, t_chunk=16, batch_shards=2, gx_dtype=jnp.bfloat16))
    ref2 = reference_forward(x2, params)
    assert pred2.shape == (B2, output_size)
    assert jnp.allclose(pred2, ref2, atol=3e-2, rtol=3e-2), float(jnp.max(jnp.abs(pred2 - ref2)))

    print("KERNEL_OK")
</pallas_src>

<mosaic_0001>
module attributes {stable_mosaic.version = 11 : i64} {
  func.func @lstm_seq_kernel(%arg0: i32, %arg1: i32, %arg2: memref<1x128x16xbf16, #tpu.memory_space<vmem>>, %arg3: memref<16x128xbf16, #tpu.memory_space<vmem>>, %arg4: memref<32x128xbf16, #tpu.memory_space<vmem>>, %arg5: memref<1x128xf32, #tpu.memory_space<vmem>>, %arg6: memref<32x4xbf16, #tpu.memory_space<vmem>>, %arg7: memref<1x4xf32, #tpu.memory_space<vmem>>, %arg8: memref<1x8x4xf32, #tpu.memory_space<vmem>>, %arg9: memref<8x32xf32, #tpu.memory_space<vmem>>, %arg10: memref<8x32xf32, #tpu.memory_space<vmem>>, %arg11: memref<128x128xf32, #tpu.memory_space<vmem>>) attributes {dimension_semantics = [#tpu.dimension_semantics<parallel>, #tpu.dimension_semantics<arbitrary>], iteration_bounds = array<i64: 1, 1>, scalar_prefetch = 0 : i64, scratch_operands = 3 : i64, tpu.core_type = #tpu.core_type<tc>, window_params = [{transform_indices = @transform_0, window_bounds = array<i64: 1, 128, 16>}, {pipeline_mode = #tpu.pipeline_mode<synchronous>, transform_indices = @transform_1, window_bounds = array<i64: 16, 128>}, {pipeline_mode = #tpu.pipeline_mode<synchronous>, transform_indices = @transform_2, window_bounds = array<i64: 32, 128>}, {pipeline_mode = #tpu.pipeline_mode<synchronous>, transform_indices = @transform_3, window_bounds = array<i64: 1, 128>}, {pipeline_mode = #tpu.pipeline_mode<synchronous>, transform_indices = @transform_4, window_bounds = array<i64: 32, 4>}, {pipeline_mode = #tpu.pipeline_mode<synchronous>, transform_indices = @transform_5, window_bounds = array<i64: 1, 4>}, {transform_indices = @transform_6, window_bounds = array<i64: 1, 8, 4>}]} {
    %c0_i32 = arith.constant 0 : i32
    %0 = arith.cmpi eq, %arg1, %c0_i32 : i32
    %1 = arith.extui %0 : i1 to i32
    %c0_i32_0 = arith.constant 0 : i32
    %2 = arith.cmpi ne, %1, %c0_i32_0 : i32
    scf.if %2 {
      %cst_214 = arith.constant 0.000000e+00 : f32
      %627 = vector.broadcast %cst_214 : f32 to vector<8x32xf32>
      %c0_215 = arith.constant 0 : index
      %c0_216 = arith.constant 0 : index
      %628 = vector.load %arg9[%c0_215, %c0_216] : memref<8x32xf32, #tpu.memory_space<vmem>>, vector<8x32xf32>
      tpu.vector_store %arg9[%c0_215, %c0_216], %627 {strides = array<i32>} : memref<8x32xf32, #tpu.memory_space<vmem>>, vector<8x32xf32>,
      %cst_217 = arith.constant 0.000000e+00 : f32
      %629 = vector.broadcast %cst_217 : f32 to vector<8x32xf32>
      %c0_218 = arith.constant 0 : index
      %c0_219 = arith.constant 0 : index
      %630 = vector.load %arg10[%c0_218, %c0_219] : memref<8x32xf32, #tpu.memory_space<vmem>>, vector<8x32xf32>
      tpu.vector_store %arg10[%c0_218, %c0_219], %629 {strides = array<i32>} : memref<8x32xf32, #tpu.memory_space<vmem>>, vector<8x32xf32>,
    } else {
    }
    %c0 = arith.constant 0 : index
    %c0_1 = arith.constant 0 : index
    %c0_2 = arith.constant 0 : index
    %3 = vector.load %arg2[%c0, %c0_1, %c0_2] : memref<1x128x16xbf16, #tpu.memory_space<vmem>>, vector<1x128x16xbf16>
    %4 = vector.shape_cast %3 : vector<1x128x16xbf16> to vector<128x16xbf16>
    %c0_3 = arith.constant 0 : index
    %c0_4 = arith.constant 0 : index
    %5 = vector.load %arg3[%c0_3, %c0_4] : memref<16x128xbf16, #tpu.memory_space<vmem>>, vector<16x128xbf16>
    %cst = arith.constant dense<0.000000e+00> : vector<128x128xf32>
    %6 = tpu.matmul %4, %5, %cst {dimension_numbers = #tpu.dot_dimension_numbers<[1], [0], [0], [1], [0, 0, 1, 1], [], []>} : vector<128x16xbf16>, vector<16x128xbf16>, vector<128x128xf32> -> vector<128x128xf32>
    %c0_5 = arith.constant 0 : index
    %c0_6 = arith.constant 0 : index
    %7 = vector.load %arg5[%c0_5, %c0_6] : memref<1x128xf32, #tpu.memory_space<vmem>>, vector<1x128xf32>
    %8 = vector.broadcast %7 : vector<1x128xf32> to vector<128x128xf32>
    %9 = arith.addf %6, %8 : vector<128x128xf32>
    %c0_7 = arith.constant 0 : index
    %c0_8 = arith.constant 0 : index
    %10 = vector.load %arg11[%c0_7, %c0_8] : memref<128x128xf32, #tpu.memory_space<vmem>>, vector<128x128xf32>
    tpu.vector_store %arg11[%c0_7, %c0_8], %9 {strides = array<i32>} : memref<128x128xf32, #tpu.memory_space<vmem>>, vector<128x128xf32>,
    %c0_9 = arith.constant 0 : index
    %c0_10 = arith.constant 0 : index
    %11 = vector.load %arg4[%c0_9, %c0_10] : memref<32x128xbf16, #tpu.memory_space<vmem>>, vector<32x128xbf16>
    %c0_11 = arith.constant 0 : index
    %c0_12 = arith.constant 0 : index
    %12 = vector.load %arg9[%c0_11, %c0_12] : memref<8x32xf32, #tpu.memory_space<vmem>>, vector<8x32xf32>
    %c0_13 = arith.constant 0 : index
    %c0_14 = arith.constant 0 : index
    %13 = vector.load %arg10[%c0_13, %c0_14] : memref<8x32xf32, #tpu.memory_space<vmem>>, vector<8x32xf32>
    %c0_i32_15 = arith.constant 0 : i32
    %c8_i32 = arith.constant 8 : i32
    %14 = arith.muli %c0_i32_15, %c8_i32 : i32
    %15 = tpu.assume_multiple %14, 8 : i32
    %16 = arith.index_cast %15 : i32 to index
    %c0_16 = arith.constant 0 : index
    %17 = vector.load %arg11[%16, %c0_16] : memref<128x128xf32, #tpu.memory_space<vmem>>, vector<8x128xf32>
    %18 = arith.truncf %12 : vector<8x32xf32> to vector<8x32xbf16>
    %cst_17 = arith.constant dense<0.000000e+00> : vector<8x128xf32>
    %19 = tpu.matmul %18, %11, %cst_17 {dimension_numbers = #tpu.dot_dimension_numbers<[1], [0], [0], [1], [0, 0, 1, 1], [], []>} : vector<8x32xbf16>, vector<32x128xbf16>, vector<8x128xf32> -> vector<8x128xf32>
    %20 = arith.addf %17, %19 : vector<8x128xf32>
    %21 = vector.extract_strided_slice %20 {offsets = [0, 0], sizes = [8, 32], strides = [1, 1]} : vector<8x128xf32> to vector<8x32xf32>
    %cst_18 = arith.constant 5.000000e-01 : f32
    %22 = vector.broadcast %cst_18 : f32 to vector<8x32xf32>
    %23 = arith.mulf %22, %21 : vector<8x32xf32>
    %24 = math.tanh %23 : vector<8x32xf32>
    %cst_19 = arith.constant 5.000000e-01 : f32
    %25 = vector.broadcast %cst_19 : f32 to vector<8x32xf32>
    %26 = arith.mulf %25, %24 : vector<8x32xf32>
    %cst_20 = arith.constant 5.000000e-01 : f32
    %27 = vector.broadcast %cst_20 : f32 to vector<8x32xf32>
    %28 = arith.addf %26, %27 : vector<8x32xf32>
    %29 = vector.extract_strided_slice %20 {offsets = [0, 32], sizes = [8, 32], strides = [1, 1]} : vector<8x128xf32> to vector<8x32xf32>
    %cst_21 = arith.constant 5.000000e-01 : f32
    %30 = vector.broadcast %cst_21 : f32 to vector<8x32xf32>
    %31 = arith.mulf %30, %29 : vector<8x32xf32>
    %32 = math.tanh %31 : vector<8x32xf32>
    %cst_22 = arith.constant 5.000000e-01 : f32
    %33 = vector.broadcast %cst_22 : f32 to vector<8x32xf32>
    %34 = arith.mulf %33, %32 : vector<8x32xf32>
    %cst_23 = arith.constant 5.000000e-01 : f32
    %35 = vector.broadcast %cst_23 : f32 to vector<8x32xf32>
    %36 = arith.addf %34, %35 : vector<8x32xf32>
    %37 = vector.extract_strided_slice %20 {offsets = [0, 64], sizes = [8, 32], strides = [1, 1]} : vector<8x128xf32> to vector<8x32xf32>
    %38 = math.tanh %37 : vector<8x32xf32>
    %39 = vector.extract_strided_slice %20 {offsets = [0, 96], sizes = [8, 32], strides = [1, 1]} : vector<8x128xf32> to vector<8x32xf32>
    %cst_24 = arith.constant 5.000000e-01 : f32
    %40 = vector.broadcast %cst_24 : f32 to vector<8x32xf32>
    %41 = arith.mulf %40, %39 : vector<8x32xf32>
    %42 = math.tanh %41 : vector<8x32xf32>
    %cst_25 = arith.constant 5.000000e-01 : f32
    %43 = vector.broadcast %cst_25 : f32 to vector<8x32xf32>
    %44 = arith.mulf %43, %42 : vector<8x32xf32>
    %cst_26 = arith.constant 5.000000e-01 : f32
    %45 = vector.broadcast %cst_26 : f32 to vector<8x32xf32>
    %46 = arith.addf %44, %45 : vector<8x32xf32>
    %47 = arith.mulf %36, %13 : vector<8x32xf32>
    %48 = arith.mulf %28, %38 : vector<8x32xf32>
    %49 = arith.addf %47, %48 : vector<8x32xf32>
    %50 = math.tanh %49 : vector<8x32xf32>
    %51 = arith.mulf %46, %50 : vector<8x32xf32>
    %c1_i32 = arith.constant 1 : i32
    %c8_i32_27 = arith.constant 8 : i32
    %52 = arith.muli %c1_i32, %c8_i32_27 : i32
    %53 = tpu.assume_multiple %52, 8 : i32
    %54 = arith.index_cast %53 : i32 to index
    %c0_28 = arith.constant 0 : index
    %55 = vector.load %arg11[%54, %c0_28] : memref<128x128xf32, #tpu.memory_space<vmem>>, vector<8x128xf32>
    %56 = arith.truncf %51 : vector<8x32xf32> to vector<8x32xbf16>
    %cst_29 = arith.constant dense<0.000000e+00> : vector<8x128xf32>
    %57 = tpu.matmul %56, %11, %cst_29 {dimension_numbers = #tpu.dot_dimension_numbers<[1], [0], [0], [1], [0, 0, 1, 1], [], []>} : vector<8x32xbf16>, vector<32x128xbf16>, vector<8x128xf32> -> vector<8x128xf32>
    %58 = arith.addf %55, %57 : vector<8x128xf32>
    %59 = vector.extract_strided_slice %58 {offsets = [0, 0], sizes = [8, 32], strides = [1, 1]} : vector<8x128xf32> to vector<8x32xf32>
    %cst_30 = arith.constant 5.000000e-01 : f32
    %60 = vector.broadcast %cst_30 : f32 to vector<8x32xf32>
    %61 = arith.mulf %60, %59 : vector<8x32xf32>
    %62 = math.tanh %61 : vector<8x32xf32>
    %cst_31 = arith.constant 5.000000e-01 : f32
    %63 = vector.broadcast %cst_31 : f32 to vector<8x32xf32>
    %64 = arith.mulf %63, %62 : vector<8x32xf32>
    %cst_32 = arith.constant 5.000000e-01 : f32
    %65 = vector.broadcast %cst_32 : f32 to vector<8x32xf32>
    %66 = arith.addf %64, %65 : vector<8x32xf32>
    %67 = vector.extract_strided_slice %58 {offsets = [0, 32], sizes = [8, 32], strides = [1, 1]} : vector<8x128xf32> to vector<8x32xf32>
    %cst_33 = arith.constant 5.000000e-01 : f32
    %68 = vector.broadcast %cst_33 : f32 to vector<8x32xf32>
    %69 = arith.mulf %68, %67 : vector<8x32xf32>
    %70 = math.tanh %69 : vector<8x32xf32>
    %cst_34 = arith.constant 5.000000e-01 : f32
    %71 = vector.broadcast %cst_34 : f32 to vector<8x32xf32>
    %72 = arith.mulf %71, %70 : vector<8x32xf32>
    %cst_35 = arith.constant 5.000000e-01 : f32
    %73 = vector.broadcast %cst_35 : f32 to vector<8x32xf32>
    %74 = arith.addf %72, %73 : vector<8x32xf32>
    %75 = vector.extract_strided_slice %58 {offsets = [0, 64], sizes = [8, 32], strides = [1, 1]} : vector<8x128xf32> to vector<8x32xf32>
    %76 = math.tanh %75 : vector<8x32xf32>
    %77 = vector.extract_strided_slice %58 {offsets = [0, 96], sizes = [8, 32], strides = [1, 1]} : vector<8x128xf32> to vector<8x32xf32>
    %cst_36 = arith.constant 5.000000e-01 : f32
    %78 = vector.broadcast %cst_36 : f32 to vector<8x32xf32>
    %79 = arith.mulf %78, %77 : vector<8x32xf32>
    %80 = math.tanh %79 : vector<8x32xf32>
    %cst_37 = arith.constant 5.000000e-01 : f32
    %81 = vector.broadcast %cst_37 : f32 to vector<8x32xf32>
    %82 = arith.mulf %81, %80 : vector<8x32xf32>
    %cst_38 = arith.constant 5.000000e-01 : f32
    %83 = vector.broadcast %cst_38 : f32 to vector<8x32xf32>
    %84 = arith.addf %82, %83 : vector<8x32xf32>
    %85 = arith.mulf %74, %49 : vector<8x32xf32>
    %86 = arith.mulf %66, %76 : vector<8x32xf32>
    %87 = arith.addf %85, %86 : vector<8x32xf32>
    %88 = math.tanh %87 : vector<8x32xf32>
    %89 = arith.mulf %84, %88 : vector<8x32xf32>
    %c2_i32 = arith.constant 2 : i32
    %c8_i32_39 = arith.constant 8 : i32
    %90 = arith.muli %c2_i32, %c8_i32_39 : i32
    %91 = tpu.assume_multiple %90, 8 : i32
    %92 = arith.index_cast %91 : i32 to index
    %c0_40 = arith.constant 0 : index
    %93 = vector.load %arg11[%92, %c0_40] : memref<128x128xf32, #tpu.memory_space<vmem>>, vector<8x128xf32>
    %94 = arith.truncf %89 : vector<8x32xf32> to vector<8x32xbf16>
    %cst_41 = arith.constant dense<0.000000e+00> : vector<8x128xf32>
    %95 = tpu.matmul %94, %11, %cst_41 {dimension_numbers = #tpu.dot_dimension_numbers<[1], [0], [0], [1], [0, 0, 1, 1], [], []>} : vector<8x32xbf16>, vector<32x128xbf16>, vector<8x128xf32> -> vector<8x128xf32>
    %96 = arith.addf %93, %95 : vector<8x128xf32>
    %97 = vector.extract_strided_slice %96 {offsets = [0, 0], sizes = [8, 32], strides = [1, 1]} : vector<8x128xf32> to vector<8x32xf32>
    %cst_42 = arith.constant 5.000000e-01 : f32
    %98 = vector.broadcast %cst_42 : f32 to vector<8x32xf32>
    %99 = arith.mulf %98, %97 : vector<8x32xf32>
    %100 = math.tanh %99 : vector<8x32xf32>
    %cst_43 = arith.constant 5.000000e-01 : f32
    %101 = vector.broadcast %cst_43 : f32 to vector<8x32xf32>
    %102 = arith.mulf %101, %100 : vector<8x32xf32>
    %cst_44 = arith.constant 5.000000e-01 : f32
    %103 = vector.broadcast %cst_44 : f32 to vector<8x32xf32>
    %104 = arith.addf %102, %103 : vector<8x32xf32>
    %105 = vector.extract_strided_slice %96 {offsets = [0, 32], sizes = [8, 32], strides = [1, 1]} : vector<8x128xf32> to vector<8x32xf32>
    %cst_45 = arith.constant 5.000000e-01 : f32
    %106 = vector.broadcast %cst_45 : f32 to vector<8x32xf32>
    %107 = arith.mulf %106, %105 : vector<8x32xf32>
    %108 = math.tanh %107 : vector<8x32xf32>
    %cst_46 = arith.constant 5.000000e-01 : f32
    %109 = vector.broadcast %cst_46 : f32 to vector<8x32xf32>
    %110 = arith.mulf %109, %108 : vector<8x32xf32>
    %cst_47 = arith.constant 5.000000e-01 : f32
    %111 = vector.broadcast %cst_47 : f32 to vector<8x32xf32>
    %112 = arith.addf %110, %111 : vector<8x32xf32>
    %113 = vector.extract_strided_slice %96 {offsets = [0, 64], sizes = [8, 32], strides = [1, 1]} : vector<8x128xf32> to vector<8x32xf32>
    %114 = math.tanh %113 : vector<8x32xf32>
    %115 = vector.extract_strided_slice %96 {offsets = [0, 96], sizes = [8, 32], strides = [1, 1]} : vector<8x128xf32> to vector<8x32xf32>
    %cst_48 = arith.constant 5.000000e-01 : f32
    %116 = vector.broadcast %cst_48 : f32 to vector<8x32xf32>
    %117 = arith.mulf %116, %115 : vector<8x32xf32>
    %118 = math.tanh %117 : vector<8x32xf32>
    %cst_49 = arith.constant 5.000000e-01 : f32
    %119 = vector.broadcast %cst_49 : f32 to vector<8x32xf32>
    %120 = arith.mulf %119, %118 : vector<8x32xf32>
    %cst_50 = arith.constant 5.000000e-01 : f32
    %121 = vector.broadcast %cst_50 : f32 to vector<8x32xf32>
    %122 = arith.addf %120, %121 : vector<8x32xf32>
    %123 = arith.mulf %112, %87 : vector<8x32xf32>
    %124 = arith.mulf %104, %114 : vector<8x32xf32>
    %125 = arith.addf %123, %124 : vector<8x32xf32>
    %126 = math.tanh %125 : vector<8x32xf32>
    %127 = arith.mulf %122, %126 : vector<8x32xf32>
    %c3_i32 = arith.constant 3 : i32
    %c8_i32_51 = arith.constant 8 : i32
    %128 = arith.muli %c3_i32, %c8_i32_51 : i32
    %129 = tpu.assume_multiple %128, 8 : i32
    %130 = arith.index_cast %129 : i32 to index
    %c0_52 = arith.constant 0 : index
    %131 = vector.load %arg11[%130, %c0_52] : memref<128x128xf32, #tpu.memory_space<vmem>>, vector<8x128xf32>
    %132 = arith.truncf %127 : vector<8x32xf32> to vector<8x32xbf16>
    %cst_53 = arith.constant dense<0.000000e+00> : vector<8x128xf32>
    %133 = tpu.matmul %132, %11, %cst_53 {dimension_numbers = #tpu.dot_dimension_numbers<[1], [0], [0], [1], [0, 0, 1, 1], [], []>} : vector<8x32xbf16>, vector<32x128xbf16>, vector<8x128xf32> -> vector<8x128xf32>
    %134 = arith.addf %131, %133 : vector<8x128xf32>
    %135 = vector.extract_strided_slice %134 {offsets = [0, 0], sizes = [8, 32], strides = [1, 1]} : vector<8x128xf32> to vector<8x32xf32>
    %cst_54 = arith.constant 5.000000e-01 : f32
    %136 = vector.broadcast %cst_54 : f32 to vector<8x32xf32>
    %137 = arith.mulf %136, %135 : vector<8x32xf32>
    %138 = math.tanh %137 : vector<8x32xf32>
    %cst_55 = arith.constant 5.000000e-01 : f32
    %139 = vector.broadcast %cst_55 : f32 to vector<8x32xf32>
    %140 = arith.mulf %139, %138 : vector<8x32xf32>
    %cst_56 = arith.constant 5.000000e-01 : f32
    %141 = vector.broadcast %cst_56 : f32 to vector<8x32xf32>
    %142 = arith.addf %140, %141 : vector<8x32xf32>
    %143 = vector.extract_strided_slice %134 {offsets = [0, 32], sizes = [8, 32], strides = [1, 1]} : vector<8x128xf32> to vector<8x32xf32>
    %cst_57 = arith.constant 5.000000e-01 : f32
    %144 = vector.broadcast %cst_57 : f32 to vector<8x32xf32>
    %145 = arith.mulf %144, %143 : vector<8x32xf32>
    %146 = math.tanh %145 : vector<8x32xf32>
    %cst_58 = arith.constant 5.000000e-01 : f32
    %147 = vector.broadcast %cst_58 : f32 to vector<8x32xf32>
    %148 = arith.mulf %147, %146 : vector<8x32xf32>
    %cst_59 = arith.constant 5.000000e-01 : f32
    %149 = vector.broadcast %cst_59 : f32 to vector<8x32xf32>
    %150 = arith.addf %148, %149 : vector<8x32xf32>
    %151 = vector.extract_strided_slice %134 {offsets = [0, 64], sizes = [8, 32], strides = [1, 1]} : vector<8x128xf32> to vector<8x32xf32>
    %152 = math.tanh %151 : vector<8x32xf32>
    %153 = vector.extract_strided_slice %134 {offsets = [0, 96], sizes = [8, 32], strides = [1, 1]} : vector<8x128xf32> to vector<8x32xf32>
    %cst_60 = arith.constant 5.000000e-01 : f32
    %154 = vector.broadcast %cst_60 : f32 to vector<8x32xf32>
    %155 = arith.mulf %154, %153 : vector<8x32xf32>
    %156 = math.tanh %155 : vector<8x32xf32>
    %cst_61 = arith.constant 5.000000e-01 : f32
    %157 = vector.broadcast %cst_61 : f32 to vector<8x32xf32>
    %158 = arith.mulf %157, %156 : vector<8x32xf32>
    %cst_62 = arith.constant 5.000000e-01 : f32
    %159 = vector.broadcast %cst_62 : f32 to vector<8x32xf32>
    %160 = arith.addf %158, %159 : vector<8x32xf32>
    %161 = arith.mulf %150, %125 : vector<8x32xf32>
    %162 = arith.mulf %142, %152 : vector<8x32xf32>
    %163 = arith.addf %161, %162 : vector<8x32xf32>
    %164 = math.tanh %163 : vector<8x32xf32>
    %165 = arith.mulf %160, %164 : vector<8x32xf32>
    %c4_i32 = arith.constant 4 : i32
    %c8_i32_63 = arith.constant 8 : i32
    %166 = arith.muli %c4_i32, %c8_i32_63 : i32
    %167 = tpu.assume_multiple %166, 8 : i32
    %168 = arith.index_cast %167 : i32 to index
    %c0_64 = arith.constant 0 : index
    %169 = vector.load %arg11[%168, %c0_64] : memref<128x128xf32, #tpu.memory_space<vmem>>, vector<8x128xf32>
    %170 = arith.truncf %165 : vector<8x32xf32> to vector<8x32xbf16>
    %cst_65 = arith.constant dense<0.000000e+00> : vector<8x128xf32>
    %171 = tpu.matmul %170, %11, %cst_65 {dimension_numbers = #tpu.dot_dimension_numbers<[1], [0], [0], [1], [0, 0, 1, 1], [], []>} : vector<8x32xbf16>, vector<32x128xbf16>, vector<8x128xf32> -> vector<8x128xf32>
    %172 = arith.addf %169, %171 : vector<8x128xf32>
    %173 = vector.extract_strided_slice %172 {offsets = [0, 0], sizes = [8, 32], strides = [1, 1]} : vector<8x128xf32> to vector<8x32xf32>
    %cst_66 = arith.constant 5.000000e-01 : f32
    %174 = vector.broadcast %cst_66 : f32 to vector<8x32xf32>
    %175 = arith.mulf %174, %173 : vector<8x32xf32>
    %176 = math.tanh %175 : vector<8x32xf32>
    %cst_67 = arith.constant 5.000000e-01 : f32
    %177 = vector.broadcast %cst_67 : f32 to vector<8x32xf32>
    %178 = arith.mulf %177, %176 : vector<8x32xf32>
    %cst_68 = arith.constant 5.000000e-01 : f32
    %179 = vector.broadcast %cst_68 : f32 to vector<8x32xf32>
    %180 = arith.addf %178, %179 : vector<8x32xf32>
    %181 = vector.extract_strided_slice %172 {offsets = [0, 32], sizes = [8, 32], strides = [1, 1]} : vector<8x128xf32> to vector<8x32xf32>
    %cst_69 = arith.constant 5.000000e-01 : f32
    %182 = vector.broadcast %cst_69 : f32 to vector<8x32xf32>
    %183 = arith.mulf %182, %181 : vector<8x32xf32>
    %184 = math.tanh %183 : vector<8x32xf32>
    %cst_70 = arith.constant 5.000000e-01 : f32
    %185 = vector.broadcast %cst_70 : f32 to vector<8x32xf32>
    %186 = arith.mulf %185, %184 : vector<8x32xf32>
    %cst_71 = arith.constant 5.000000e-01 : f32
    %187 = vector.broadcast %cst_71 : f32 to vector<8x32xf32>
    %188 = arith.addf %186, %187 : vector<8x32xf32>
    %189 = vector.extract_strided_slice %172 {offsets = [0, 64], sizes = [8, 32], strides = [1, 1]} : vector<8x128xf32> to vector<8x32xf32>
    %190 = math.tanh %189 : vector<8x32xf32>
    %191 = vector.extract_strided_slice %172 {offsets = [0, 96], sizes = [8, 32], strides = [1, 1]} : vector<8x128xf32> to vector<8x32xf32>
    %cst_72 = arith.constant 5.000000e-01 : f32
    %192 = vector.broadcast %cst_72 : f32 to vector<8x32xf32>
    %193 = arith.mulf %192, %191 : vector<8x32xf32>
    %194 = math.tanh %193 : vector<8x32xf32>
    %cst_73 = arith.constant 5.000000e-01 : f32
    %195 = vector.broadcast %cst_73 : f32 to vector<8x32xf32>
    %196 = arith.mulf %195, %194 : vector<8x32xf32>
    %cst_74 = arith.constant 5.000000e-01 : f32
    %197 = vector.broadcast %cst_74 : f32 to vector<8x32xf32>
    %198 = arith.addf %196, %197 : vector<8x32xf32>
    %199 = arith.mulf %188, %163 : vector<8x32xf32>
    %200 = arith.mulf %180, %190 : vector<8x32xf32>
    %201 = arith.addf %199, %200 : vector<8x32xf32>
    %202 = math.tanh %201 : vector<8x32xf32>
    %203 = arith.mulf %198, %202 : vector<8x32xf32>
    %c5_i32 = arith.constant 5 : i32
    %c8_i32_75 = arith.constant 8 : i32
    %204 = arith.muli %c5_i32, %c8_i32_75 : i32
    %205 = tpu.assume_multiple %204, 8 : i32
    %206 = arith.index_cast %205 : i32 to index
    %c0_76 = arith.constant 0 : index
    %207 = vector.load %arg11[%206, %c0_76] : memref<128x128xf32, #tpu.memory_space<vmem>>, vector<8x128xf32>
    %208 = arith.truncf %203 : vector<8x32xf32> to vector<8x32xbf16>
    %cst_77 = arith.constant dense<0.000000e+00> : vector<8x128xf32>
    %209 = tpu.matmul %208, %11, %cst_77 {dimension_numbers = #tpu.dot_dimension_numbers<[1], [0], [0], [1], [0, 0, 1, 1], [], []>} : vector<8x32xbf16>, vector<32x128xbf16>, vector<8x128xf32> -> vector<8x128xf32>
    %210 = arith.addf %207, %209 : vector<8x128xf32>
    %211 = vector.extract_strided_slice %210 {offsets = [0, 0], sizes = [8, 32], strides = [1, 1]} : vector<8x128xf32> to vector<8x32xf32>
    %cst_78 = arith.constant 5.000000e-01 : f32
    %212 = vector.broadcast %cst_78 : f32 to vector<8x32xf32>
    %213 = arith.mulf %212, %211 : vector<8x32xf32>
    %214 = math.tanh %213 : vector<8x32xf32>
    %cst_79 = arith.constant 5.000000e-01 : f32
    %215 = vector.broadcast %cst_79 : f32 to vector<8x32xf32>
    %216 = arith.mulf %215, %214 : vector<8x32xf32>
    %cst_80 = arith.constant 5.000000e-01 : f32
    %217 = vector.broadcast %cst_80 : f32 to vector<8x32xf32>
    %218 = arith.addf %216, %217 : vector<8x32xf32>
    %219 = vector.extract_strided_slice %210 {offsets = [0, 32], sizes = [8, 32], strides = [1, 1]} : vector<8x128xf32> to vector<8x32xf32>
    %cst_81 = arith.constant 5.000000e-01 : f32
    %220 = vector.broadcast %cst_81 : f32 to vector<8x32xf32>
    %221 = arith.mulf %220, %219 : vector<8x32xf32>
    %222 = math.tanh %221 : vector<8x32xf32>
    %cst_82 = arith.constant 5.000000e-01 : f32
    %223 = vector.broadcast %cst_82 : f32 to vector<8x32xf32>
    %224 = arith.mulf %223, %222 : vector<8x32xf32>
    %cst_83 = arith.constant 5.000000e-01 : f32
    %225 = vector.broadcast %cst_83 : f32 to vector<8x32xf32>
    %226 = arith.addf %224, %225 : vector<8x32xf32>
    %227 = vector.extract_strided_slice %210 {offsets = [0, 64], sizes = [8, 32], strides = [1, 1]} : vector<8x128xf32> to vector<8x32xf32>
    %228 = math.tanh %227 : vector<8x32xf32>
    %229 = vector.extract_strided_slice %210 {offsets = [0, 96], sizes = [8, 32], strides = [1, 1]} : vector<8x128xf32> to vector<8x32xf32>
    %cst_84 = arith.constant 5.000000e-01 : f32
    %230 = vector.broadcast %cst_84 : f32 to vector<8x32xf32>
    %231 = arith.mulf %230, %229 : vector<8x32xf32>
    %232 = math.tanh %231 : vector<8x32xf32>
    %cst_85 = arith.constant 5.000000e-01 : f32
    %233 = vector.broadcast %cst_85 : f32 to vector<8x32xf32>
    %234 = arith.mulf %233, %232 : vector<8x32xf32>
    %cst_86 = arith.constant 5.000000e-01 : f32
    %235 = vector.broadcast %cst_86 : f32 to vector<8x32xf32>
    %236 = arith.addf %234, %235 : vector<8x32xf32>
    %237 = arith.mulf %226, %201 : vector<8x32xf32>
    %238 = arith.mulf %218, %228 : vector<8x32xf32>
    %239 = arith.addf %237, %238 : vector<8x32xf32>
    %240 = math.tanh %239 : vector<8x32xf32>
    %241 = arith.mulf %236, %240 : vector<8x32xf32>
    %c6_i32 = arith.constant 6 : i32
    %c8_i32_87 = arith.constant 8 : i32
    %242 = arith.muli %c6_i32, %c8_i32_87 : i32
    %243 = tpu.assume_multiple %242, 8 : i32
    %244 = arith.index_cast %243 : i32 to index
    %c0_88 = arith.constant 0 : index
    %245 = vector.load %arg11[%244, %c0_88] : memref<128x128xf32, #tpu.memory_space<vmem>>, vector<8x128xf32>
    %246 = arith.truncf %241 : vector<8x32xf32> to vector<8x32xbf16>
    %cst_89 = arith.constant dense<0.000000e+00> : vector<8x128xf32>
    %247 = tpu.matmul %246, %11, %cst_89 {dimension_numbers = #tpu.dot_dimension_numbers<[1], [0], [0], [1], [0, 0, 1, 1], [], []>} : vector<8x32xbf16>, vector<32x128xbf16>, vector<8x128xf32> -> vector<8x128xf32>
    %248 = arith.addf %245, %247 : vector<8x128xf32>
    %249 = vector.extract_strided_slice %248 {offsets = [0, 0], sizes = [8, 32], strides = [1, 1]} : vector<8x128xf32> to vector<8x32xf32>
    %cst_90 = arith.constant 5.000000e-01 : f32
    %250 = vector.broadcast %cst_90 : f32 to vector<8x32xf32>
    %251 = arith.mulf %250, %249 : vector<8x32xf32>
    %252 = math.tanh %251 : vector<8x32xf32>
    %cst_91 = arith.constant 5.000000e-01 : f32
    %253 = vector.broadcast %cst_91 : f32 to vector<8x32xf32>
    %254 = arith.mulf %253, %252 : vector<8x32xf32>
    %cst_92 = arith.constant 5.000000e-01 : f32
    %255 = vector.broadcast %cst_92 : f32 to vector<8x32xf32>
    %256 = arith.addf %254, %255 : vector<8x32xf32>
    %257 = vector.extract_strided_slice %248 {offsets = [0, 32], sizes = [8, 32], strides = [1, 1]} : vector<8x128xf32> to vector<8x32xf32>
    %cst_93 = arith.constant 5.000000e-01 : f32
    %258 = vector.broadcast %cst_93 : f32 to vector<8x32xf32>
    %259 = arith.mulf %258, %257 : vector<8x32xf32>
    %260 = math.tanh %259 : vector<8x32xf32>
    %cst_94 = arith.constant 5.000000e-01 : f32
    %261 = vector.broadcast %cst_94 : f32 to vector<8x32xf32>
    %262 = arith.mulf %261, %260 : vector<8x32xf32>
    %cst_95 = arith.constant 5.000000e-01 : f32
    %263 = vector.broadcast %cst_95 : f32 to vector<8x32xf32>
    %264 = arith.addf %262, %263 : vector<8x32xf32>
    %265 = vector.extract_strided_slice %248 {offsets = [0, 64], sizes = [8, 32], strides = [1, 1]} : vector<8x128xf32> to vector<8x32xf32>
    %266 = math.tanh %265 : vector<8x32xf32>
    %267 = vector.extract_strided_slice %248 {offsets = [0, 96], sizes = [8, 32], strides = [1, 1]} : vector<8x128xf32> to vector<8x32xf32>
    %cst_96 = arith.constant 5.000000e-01 : f32
    %268 = vector.broadcast %cst_96 : f32 to vector<8x32xf32>
    %269 = arith.mulf %268, %267 : vector<8x32xf32>
    %270 = math.tanh %269 : vector<8x32xf32>
    %cst_97 = arith.constant 5.000000e-01 : f32
    %271 = vector.broadcast %cst_97 : f32 to vector<8x32xf32>
    %272 = arith.mulf %271, %270 : vector<8x32xf32>
    %cst_98 = arith.constant 5.000000e-01 : f32
    %273 = vector.broadcast %cst_98 : f32 to vector<8x32xf32>
    %274 = arith.addf %272, %273 : vector<8x32xf32>
    %275 = arith.mulf %264, %239 : vector<8x32xf32>
    %276 = arith.mulf %256, %266 : vector<8x32xf32>
    %277 = arith.addf %275, %276 : vector<8x32xf32>
    %278 = math.tanh %277 : vector<8x32xf32>
    %279 = arith.mulf %274, %278 : vector<8x32xf32>
    %c7_i32 = arith.constant 7 : i32
    %c8_i32_99 = arith.constant 8 : i32
    %280 = arith.muli %c7_i32, %c8_i32_99 : i32
    %281 = tpu.assume_multiple %280, 8 : i32
    %282 = arith.index_cast %281 : i32 to index
    %c0_100 = arith.constant 0 : index
    %283 = vector.load %arg11[%282, %c0_100] : memref<128x128xf32, #tpu.memory_space<vmem>>, vector<8x128xf32>
    %284 = arith.truncf %279 : vector<8x32xf32> to vector<8x32xbf16>
    %cst_101 = arith.constant dense<0.000000e+00> : vector<8x128xf32>
    %285 = tpu.matmul %284, %11, %cst_101 {dimension_numbers = #tpu.dot_dimension_numbers<[1], [0], [0], [1], [0, 0, 1, 1], [], []>} : vector<8x32xbf16>, vector<32x128xbf16>, vector<8x128xf32> -> vector<8x128xf32>
    %286 = arith.addf %283, %285 : vector<8x128xf32>
    %287 = vector.extract_strided_slice %286 {offsets = [0, 0], sizes = [8, 32], strides = [1, 1]} : vector<8x128xf32> to vector<8x32xf32>
    %cst_102 = arith.constant 5.000000e-01 : f32
    %288 = vector.broadcast %cst_102 : f32 to vector<8x32xf32>
    %289 = arith.mulf %288, %287 : vector<8x32xf32>
    %290 = math.tanh %289 : vector<8x32xf32>
    %cst_103 = arith.constant 5.000000e-01 : f32
    %291 = vector.broadcast %cst_103 : f32 to vector<8x32xf32>
    %292 = arith.mulf %291, %290 : vector<8x32xf32>
    %cst_104 = arith.constant 5.000000e-01 : f32
    %293 = vector.broadcast %cst_104 : f32 to vector<8x32xf32>
    %294 = arith.addf %292, %293 : vector<8x32xf32>
    %295 = vector.extract_strided_slice %286 {offsets = [0, 32], sizes = [8, 32], strides = [1, 1]} : vector<8x128xf32> to vector<8x32xf32>
    %cst_105 = arith.constant 5.000000e-01 : f32
    %296 = vector.broadcast %cst_105 : f32 to vector<8x32xf32>
    %297 = arith.mulf %296, %295 : vector<8x32xf32>
    %298 = math.tanh %297 : vector<8x32xf32>
    %cst_106 = arith.constant 5.000000e-01 : f32
    %299 = vector.broadcast %cst_106 : f32 to vector<8x32xf32>
    %300 = arith.mulf %299, %298 : vector<8x32xf32>
    %cst_107 = arith.constant 5.000000e-01 : f32
    %301 = vector.broadcast %cst_107 : f32 to vector<8x32xf32>
    %302 = arith.addf %300, %301 : vector<8x32xf32>
    %303 = vector.extract_strided_slice %286 {offsets = [0, 64], sizes = [8, 32], strides = [1, 1]} : vector<8x128xf32> to vector<8x32xf32>
    %304 = math.tanh %303 : vector<8x32xf32>
    %305 = vector.extract_strided_slice %286 {offsets = [0, 96], sizes = [8, 32], strides = [1, 1]} : vector<8x128xf32> to vector<8x32xf32>
    %cst_108 = arith.constant 5.000000e-01 : f32
    %306 = vector.broadcast %cst_108 : f32 to vector<8x32xf32>
    %307 = arith.mulf %306, %305 : vector<8x32xf32>
    %308 = math.tanh %307 : vector<8x32xf32>
    %cst_109 = arith.constant 5.000000e-01 : f32
    %309 = vector.broadcast %cst_109 : f32 to vector<8x32xf32>
    %310 = arith.mulf %309, %308 : vector<8x32xf32>
    %cst_110 = arith.constant 5.000000e-01 : f32
    %311 = vector.broadcast %cst_110 : f32 to vector<8x32xf32>
    %312 = arith.addf %310, %311 : vector<8x32xf32>
    %313 = arith.mulf %302, %277 : vector<8x32xf32>
    %314 = arith.mulf %294, %304 : vector<8x32xf32>
    %315 = arith.addf %313, %314 : vector<8x32xf32>
    %316 = math.tanh %315 : vector<8x32xf32>
    %317 = arith.mulf %312, %316 : vector<8x32xf32>
    %c8_i32_111 = arith.constant 8 : i32
    %c8_i32_112 = arith.constant 8 : i32
    %318 = arith.muli %c8_i32_111, %c8_i32_112 : i32
    %319 = tpu.assume_multiple %318, 8 : i32
    %320 = arith.index_cast %319 : i32 to index
    %c0_113 = arith.constant 0 : index
    %321 = vector.load %arg11[%320, %c0_113] : memref<128x128xf32, #tpu.memory_space<vmem>>, vector<8x128xf32>
    %322 = arith.truncf %317 : vector<8x32xf32> to vector<8x32xbf16>
    %cst_114 = arith.constant dense<0.000000e+00> : vector<8x128xf32>
    %323 = tpu.matmul %322, %11, %cst_114 {dimension_numbers = #tpu.dot_dimension_numbers<[1], [0], [0], [1], [0, 0, 1, 1], [], []>} : vector<8x32xbf16>, vector<32x128xbf16>, vector<8x128xf32> -> vector<8x128xf32>
    %324 = arith.addf %321, %323 : vector<8x128xf32>
    %325 = vector.extract_strided_slice %324 {offsets = [0, 0], sizes = [8, 32], strides = [1, 1]} : vector<8x128xf32> to vector<8x32xf32>
    %cst_115 = arith.constant 5.000000e-01 : f32
    %326 = vector.broadcast %cst_115 : f32 to vector<8x32xf32>
    %327 = arith.mulf %326, %325 : vector<8x32xf32>
    %328 = math.tanh %327 : vector<8x32xf32>
    %cst_116 = arith.constant 5.000000e-01 : f32
    %329 = vector.broadcast %cst_116 : f32 to vector<8x32xf32>
    %330 = arith.mulf %329, %328 : vector<8x32xf32>
    %cst_117 = arith.constant 5.000000e-01 : f32
    %331 = vector.broadcast %cst_117 : f32 to vector<8x32xf32>
    %332 = arith.addf %330, %331 : vector<8x32xf32>
    %333 = vector.extract_strided_slice %324 {offsets = [0, 32], sizes = [8, 32], strides = [1, 1]} : vector<8x128xf32> to vector<8x32xf32>
    %cst_118 = arith.constant 5.000000e-01 : f32
    %334 = vector.broadcast %cst_118 : f32 to vector<8x32xf32>
    %335 = arith.mulf %334, %333 : vector<8x32xf32>
    %336 = math.tanh %335 : vector<8x32xf32>
    %cst_119 = arith.constant 5.000000e-01 : f32
    %337 = vector.broadcast %cst_119 : f32 to vector<8x32xf32>
    %338 = arith.mulf %337, %336 : vector<8x32xf32>
    %cst_120 = arith.constant 5.000000e-01 : f32
    %339 = vector.broadcast %cst_120 : f32 to vector<8x32xf32>
    %340 = arith.addf %338, %339 : vector<8x32xf32>
    %341 = vector.extract_strided_slice %324 {offsets = [0, 64], sizes = [8, 32], strides = [1, 1]} : vector<8x128xf32> to vector<8x32xf32>
    %342 = math.tanh %341 : vector<8x32xf32>
    %343 = vector.extract_strided_slice %324 {offsets = [0, 96], sizes = [8, 32], strides = [1, 1]} : vector<8x128xf32> to vector<8x32xf32>
    %cst_121 = arith.constant 5.000000e-01 : f32
    %344 = vector.broadcast %cst_121 : f32 to vector<8x32xf32>
    %345 = arith.mulf %344, %343 : vector<8x32xf32>
    %346 = math.tanh %345 : vector<8x32xf32>
    %cst_122 = arith.constant 5.000000e-01 : f32
    %347 = vector.broadcast %cst_122 : f32 to vector<8x32xf32>
    %348 = arith.mulf %347, %346 : vector<8x32xf32>
    %cst_123 = arith.constant 5.000000e-01 : f32
    %349 = vector.broadcast %cst_123 : f32 to vector<8x32xf32>
    %350 = arith.addf %348, %349 : vector<8x32xf32>
    %351 = arith.mulf %340, %315 : vector<8x32xf32>
    %352 = arith.mulf %332, %342 : vector<8x32xf32>
    %353 = arith.addf %351, %352 : vector<8x32xf32>
    %354 = math.tanh %353 : vector<8x32xf32>
    %355 = arith.mulf %350, %354 : vector<8x32xf32>
    %c9_i32 = arith.constant 9 : i32
    %c8_i32_124 = arith.constant 8 : i32
    %356 = arith.muli %c9_i32, %c8_i32_124 : i32
    %357 = tpu.assume_multiple %356, 8 : i32
    %358 = arith.index_cast %357 : i32 to index
    %c0_125 = arith.constant 0 : index
    %359 = vector.load %arg11[%358, %c0_125] : memref<128x128xf32, #tpu.memory_space<vmem>>, vector<8x128xf32>
    %360 = arith.truncf %355 : vector<8x32xf32> to vector<8x32xbf16>
    %cst_126 = arith.constant dense<0.000000e+00> : vector<8x128xf32>
    %361 = tpu.matmul %360, %11, %cst_126 {dimension_numbers = #tpu.dot_dimension_numbers<[1], [0], [0], [1], [0, 0, 1, 1], [], []>} : vector<8x32xbf16>, vector<32x128xbf16>, vector<8x128xf32> -> vector<8x128xf32>
    %362 = arith.addf %359, %361 : vector<8x128xf32>
    %363 = vector.extract_strided_slice %362 {offsets = [0, 0], sizes = [8, 32], strides = [1, 1]} : vector<8x128xf32> to vector<8x32xf32>
    %cst_127 = arith.constant 5.000000e-01 : f32
    %364 = vector.broadcast %cst_127 : f32 to vector<8x32xf32>
    %365 = arith.mulf %364, %363 : vector<8x32xf32>
    %366 = math.tanh %365 : vector<8x32xf32>
    %cst_128 = arith.constant 5.000000e-01 : f32
    %367 = vector.broadcast %cst_128 : f32 to vector<8x32xf32>
    %368 = arith.mulf %367, %366 : vector<8x32xf32>
    %cst_129 = arith.constant 5.000000e-01 : f32
    %369 = vector.broadcast %cst_129 : f32 to vector<8x32xf32>
    %370 = arith.addf %368, %369 : vector<8x32xf32>
    %371 = vector.extract_strided_slice %362 {offsets = [0, 32], sizes = [8, 32], strides = [1, 1]} : vector<8x128xf32> to vector<8x32xf32>
    %cst_130 = arith.constant 5.000000e-01 : f32
    %372 = vector.broadcast %cst_130 : f32 to vector<8x32xf32>
    %373 = arith.mulf %372, %371 : vector<8x32xf32>
    %374 = math.tanh %373 : vector<8x32xf32>
    %cst_131 = arith.constant 5.000000e-01 : f32
    %375 = vector.broadcast %cst_131 : f32 to vector<8x32xf32>
    %376 = arith.mulf %375, %374 : vector<8x32xf32>
    %cst_132 = arith.constant 5.000000e-01 : f32
    %377 = vector.broadcast %cst_132 : f32 to vector<8x32xf32>
    %378 = arith.addf %376, %377 : vector<8x32xf32>
    %379 = vector.extract_strided_slice %362 {offsets = [0, 64], sizes = [8, 32], strides = [1, 1]} : vector<8x128xf32> to vector<8x32xf32>
    %380 = math.tanh %379 : vector<8x32xf32>
    %381 = vector.extract_strided_slice %362 {offsets = [0, 96], sizes = [8, 32], strides = [1, 1]} : vector<8x128xf32> to vector<8x32xf32>
    %cst_133 = arith.constant 5.000000e-01 : f32
    %382 = vector.broadcast %cst_133 : f32 to vector<8x32xf32>
    %383 = arith.mulf %382, %381 : vector<8x32xf32>
    %384 = math.tanh %383 : vector<8x32xf32>
    %cst_134 = arith.constant 5.000000e-01 : f32
    %385 = vector.broadcast %cst_134 : f32 to vector<8x32xf32>
    %386 = arith.mulf %385, %384 : vector<8x32xf32>
    %cst_135 = arith.constant 5.000000e-01 : f32
    %387 = vector.broadcast %cst_135 : f32 to vector<8x32xf32>
    %388 = arith.addf %386, %387 : vector<8x32xf32>
    %389 = arith.mulf %378, %353 : vector<8x32xf32>
    %390 = arith.mulf %370, %380 : vector<8x32xf32>
    %391 = arith.addf %389, %390 : vector<8x32xf32>
    %392 = math.tanh %391 : vector<8x32xf32>
    %393 = arith.mulf %388, %392 : vector<8x32xf32>
    %c10_i32 = arith.constant 10 : i32
    %c8_i32_136 = arith.constant 8 : i32
    %394 = arith.muli %c10_i32, %c8_i32_136 : i32
    %395 = tpu.assume_multiple %394, 8 : i32
    %396 = arith.index_cast %395 : i32 to index
    %c0_137 = arith.constant 0 : index
    %397 = vector.load %arg11[%396, %c0_137] : memref<128x128xf32, #tpu.memory_space<vmem>>, vector<8x128xf32>
    %398 = arith.truncf %393 : vector<8x32xf32> to vector<8x32xbf16>
    %cst_138 = arith.constant dense<0.000000e+00> : vector<8x128xf32>
    %399 = tpu.matmul %398, %11, %cst_138 {dimension_numbers = #tpu.dot_dimension_numbers<[1], [0], [0], [1], [0, 0, 1, 1], [], []>} : vector<8x32xbf16>, vector<32x128xbf16>, vector<8x128xf32> -> vector<8x128xf32>
    %400 = arith.addf %397, %399 : vector<8x128xf32>
    %401 = vector.extract_strided_slice %400 {offsets = [0, 0], sizes = [8, 32], strides = [1, 1]} : vector<8x128xf32> to vector<8x32xf32>
    %cst_139 = arith.constant 5.000000e-01 : f32
    %402 = vector.broadcast %cst_139 : f32 to vector<8x32xf32>
    %403 = arith.mulf %402, %401 : vector<8x32xf32>
    %404 = math.tanh %403 : vector<8x32xf32>
    %cst_140 = arith.constant 5.000000e-01 : f32
    %405 = vector.broadcast %cst_140 : f32 to vector<8x32xf32>
    %406 = arith.mulf %405, %404 : vector<8x32xf32>
    %cst_141 = arith.constant 5.000000e-01 : f32
    %407 = vector.broadcast %cst_141 : f32 to vector<8x32xf32>
    %408 = arith.addf %406, %407 : vector<8x32xf32>
    %409 = vector.extract_strided_slice %400 {offsets = [0, 32], sizes = [8, 32], strides = [1, 1]} : vector<8x128xf32> to vector<8x32xf32>
    %cst_142 = arith.constant 5.000000e-01 : f32
    %410 = vector.broadcast %cst_142 : f32 to vector<8x32xf32>
    %411 = arith.mulf %410, %409 : vector<8x32xf32>
    %412 = math.tanh %411 : vector<8x32xf32>
    %cst_143 = arith.constant 5.000000e-01 : f32
    %413 = vector.broadcast %cst_143 : f32 to vector<8x32xf32>
    %414 = arith.mulf %413, %412 : vector<8x32xf32>
    %cst_144 = arith.constant 5.000000e-01 : f32
    %415 = vector.broadcast %cst_144 : f32 to vector<8x32xf32>
    %416 = arith.addf %414, %415 : vector<8x32xf32>
    %417 = vector.extract_strided_slice %400 {offsets = [0, 64], sizes = [8, 32], strides = [1, 1]} : vector<8x128xf32> to vector<8x32xf32>
    %418 = math.tanh %417 : vector<8x32xf32>
    %419 = vector.extract_strided_slice %400 {offsets = [0, 96], sizes = [8, 32], strides = [1, 1]} : vector<8x128xf32> to vector<8x32xf32>
    %cst_145 = arith.constant 5.000000e-01 : f32
    %420 = vector.broadcast %cst_145 : f32 to vector<8x32xf32>
    %421 = arith.mulf %420, %419 : vector<8x32xf32>
    %422 = math.tanh %421 : vector<8x32xf32>
    %cst_146 = arith.constant 5.000000e-01 : f32
    %423 = vector.broadcast %cst_146 : f32 to vector<8x32xf32>
    %424 = arith.mulf %423, %422 : vector<8x32xf32>
    %cst_147 = arith.constant 5.000000e-01 : f32
    %425 = vector.broadcast %cst_147 : f32 to vector<8x32xf32>
    %426 = arith.addf %424, %425 : vector<8x32xf32>
    %427 = arith.mulf %416, %391 : vector<8x32xf32>
    %428 = arith.mulf %408, %418 : vector<8x32xf32>
    %429 = arith.addf %427, %428 : vector<8x32xf32>
    %430 = math.tanh %429 : vector<8x32xf32>
    %431 = arith.mulf %426, %430 : vector<8x32xf32>
    %c11_i32 = arith.constant 11 : i32
    %c8_i32_148 = arith.constant 8 : i32
    %432 = arith.muli %c11_i32, %c8_i32_148 : i32
    %433 = tpu.assume_multiple %432, 8 : i32
    %434 = arith.index_cast %433 : i32 to index
    %c0_149 = arith.constant 0 : index
    %435 = vector.load %arg11[%434, %c0_149] : memref<128x128xf32, #tpu.memory_space<vmem>>, vector<8x128xf32>
    %436 = arith.truncf %431 : vector<8x32xf32> to vector<8x32xbf16>
    %cst_150 = arith.constant dense<0.000000e+00> : vector<8x128xf32>
    %437 = tpu.matmul %436, %11, %cst_150 {dimension_numbers = #tpu.dot_dimension_numbers<[1], [0], [0], [1], [0, 0, 1, 1], [], []>} : vector<8x32xbf16>, vector<32x128xbf16>, vector<8x128xf32> -> vector<8x128xf32>
    %438 = arith.addf %435, %437 : vector<8x128xf32>
    %439 = vector.extract_strided_slice %438 {offsets = [0, 0], sizes = [8, 32], strides = [1, 1]} : vector<8x128xf32> to vector<8x32xf32>
    %cst_151 = arith.constant 5.000000e-01 : f32
    %440 = vector.broadcast %cst_151 : f32 to vector<8x32xf32>
    %441 = arith.mulf %440, %439 : vector<8x32xf32>
    %442 = math.tanh %441 : vector<8x32xf32>
    %cst_152 = arith.constant 5.000000e-01 : f32
    %443 = vector.broadcast %cst_152 : f32 to vector<8x32xf32>
    %444 = arith.mulf %443, %442 : vector<8x32xf32>
    %cst_153 = arith.constant 5.000000e-01 : f32
    %445 = vector.broadcast %cst_153 : f32 to vector<8x32xf32>
    %446 = arith.addf %444, %445 : vector<8x32xf32>
    %447 = vector.extract_strided_slice %438 {offsets = [0, 32], sizes = [8, 32], strides = [1, 1]} : vector<8x128xf32> to vector<8x32xf32>
    %cst_154 = arith.constant 5.000000e-01 : f32
    %448 = vector.broadcast %cst_154 : f32 to vector<8x32xf32>
    %449 = arith.mulf %448, %447 : vector<8x32xf32>
    %450 = math.tanh %449 : vector<8x32xf32>
    %cst_155 = arith.constant 5.000000e-01 : f32
    %451 = vector.broadcast %cst_155 : f32 to vector<8x32xf32>
    %452 = arith.mulf %451, %450 : vector<8x32xf32>
    %cst_156 = arith.constant 5.000000e-01 : f32
    %453 = vector.broadcast %cst_156 : f32 to vector<8x32xf32>
    %454 = arith.addf %452, %453 : vector<8x32xf32>
    %455 = vector.extract_strided_slice %438 {offsets = [0, 64], sizes = [8, 32], strides = [1, 1]} : vector<8x128xf32> to vector<8x32xf32>
    %456 = math.tanh %455 : vector<8x32xf32>
    %457 = vector.extract_strided_slice %438 {offsets = [0, 96], sizes = [8, 32], strides = [1, 1]} : vector<8x128xf32> to vector<8x32xf32>
    %cst_157 = arith.constant 5.000000e-01 : f32
    %458 = vector.broadcast %cst_157 : f32 to vector<8x32xf32>
    %459 = arith.mulf %458, %457 : vector<8x32xf32>
    %460 = math.tanh %459 : vector<8x32xf32>
    %cst_158 = arith.constant 5.000000e-01 : f32
    %461 = vector.broadcast %cst_158 : f32 to vector<8x32xf32>
    %462 = arith.mulf %461, %460 : vector<8x32xf32>
    %cst_159 = arith.constant 5.000000e-01 : f32
    %463 = vector.broadcast %cst_159 : f32 to vector<8x32xf32>
    %464 = arith.addf %462, %463 : vector<8x32xf32>
    %465 = arith.mulf %454, %429 : vector<8x32xf32>
    %466 = arith.mulf %446, %456 : vector<8x32xf32>
    %467 = arith.addf %465, %466 : vector<8x32xf32>
    %468 = math.tanh %467 : vector<8x32xf32>
    %469 = arith.mulf %464, %468 : vector<8x32xf32>
    %c12_i32 = arith.constant 12 : i32
    %c8_i32_160 = arith.constant 8 : i32
    %470 = arith.muli %c12_i32, %c8_i32_160 : i32
    %471 = tpu.assume_multiple %470, 8 : i32
    %472 = arith.index_cast %471 : i32 to index
    %c0_161 = arith.constant 0 : index
    %473 = vector.load %arg11[%472, %c0_161] : memref<128x128xf32, #tpu.memory_space<vmem>>, vector<8x128xf32>
    %474 = arith.truncf %469 : vector<8x32xf32> to vector<8x32xbf16>
    %cst_162 = arith.constant dense<0.000000e+00> : vector<8x128xf32>
    %475 = tpu.matmul %474, %11, %cst_162 {dimension_numbers = #tpu.dot_dimension_numbers<[1], [0], [0], [1], [0, 0, 1, 1], [], []>} : vector<8x32xbf16>, vector<32x128xbf16>, vector<8x128xf32> -> vector<8x128xf32>
    %476 = arith.addf %473, %475 : vector<8x128xf32>
    %477 = vector.extract_strided_slice %476 {offsets = [0, 0], sizes = [8, 32], strides = [1, 1]} : vector<8x128xf32> to vector<8x32xf32>
    %cst_163 = arith.constant 5.000000e-01 : f32
    %478 = vector.broadcast %cst_163 : f32 to vector<8x32xf32>
    %479 = arith.mulf %478, %477 : vector<8x32xf32>
    %480 = math.tanh %479 : vector<8x32xf32>
    %cst_164 = arith.constant 5.000000e-01 : f32
    %481 = vector.broadcast %cst_164 : f32 to vector<8x32xf32>
    %482 = arith.mulf %481, %480 : vector<8x32xf32>
    %cst_165 = arith.constant 5.000000e-01 : f32
    %483 = vector.broadcast %cst_165 : f32 to vector<8x32xf32>
    %484 = arith.addf %482, %483 : vector<8x32xf32>
    %485 = vector.extract_strided_slice %476 {offsets = [0, 32], sizes = [8, 32], strides = [1, 1]} : vector<8x128xf32> to vector<8x32xf32>
    %cst_166 = arith.constant 5.000000e-01 : f32
    %486 = vector.broadcast %cst_166 : f32 to vector<8x32xf32>
    %487 = arith.mulf %486, %485 : vector<8x32xf32>
    %488 = math.tanh %487 : vector<8x32xf32>
    %cst_167 = arith.constant 5.000000e-01 : f32
    %489 = vector.broadcast %cst_167 : f32 to vector<8x32xf32>
    %490 = arith.mulf %489, %488 : vector<8x32xf32>
    %cst_168 = arith.constant 5.000000e-01 : f32
    %491 = vector.broadcast %cst_168 : f32 to vector<8x32xf32>
    %492 = arith.addf %490, %491 : vector<8x32xf32>
    %493 = vector.extract_strided_slice %476 {offsets = [0, 64], sizes = [8, 32], strides = [1, 1]} : vector<8x128xf32> to vector<8x32xf32>
    %494 = math.tanh %493 : vector<8x32xf32>
    %495 = vector.extract_strided_slice %476 {offsets = [0, 96], sizes = [8, 32], strides = [1, 1]} : vector<8x128xf32> to vector<8x32xf32>
    %cst_169 = arith.constant 5.000000e-01 : f32
    %496 = vector.broadcast %cst_169 : f32 to vector<8x32xf32>
    %497 = arith.mulf %496, %495 : vector<8x32xf32>
    %498 = math.tanh %497 : vector<8x32xf32>
    %cst_170 = arith.constant 5.000000e-01 : f32
    %499 = vector.broadcast %cst_170 : f32 to vector<8x32xf32>
    %500 = arith.mulf %499, %498 : vector<8x32xf32>
    %cst_171 = arith.constant 5.000000e-01 : f32
    %501 = vector.broadcast %cst_171 : f32 to vector<8x32xf32>
    %502 = arith.addf %500, %501 : vector<8x32xf32>
    %503 = arith.mulf %492, %467 : vector<8x32xf32>
    %504 = arith.mulf %484, %494 : vector<8x32xf32>
    %505 = arith.addf %503, %504 : vector<8x32xf32>
    %506 = math.tanh %505 : vector<8x32xf32>
    %507 = arith.mulf %502, %506 : vector<8x32xf32>
    %c13_i32 = arith.constant 13 : i32
    %c8_i32_172 = arith.constant 8 : i32
    %508 = arith.muli %c13_i32, %c8_i32_172 : i32
    %509 = tpu.assume_multiple %508, 8 : i32
    %510 = arith.index_cast %509 : i32 to index
    %c0_173 = arith.constant 0 : index
    %511 = vector.load %arg11[%510, %c0_173] : memref<128x128xf32, #tpu.memory_space<vmem>>, vector<8x128xf32>
    %512 = arith.truncf %507 : vector<8x32xf32> to vector<8x32xbf16>
    %cst_174 = arith.constant dense<0.000000e+00> : vector<8x128xf32>
    %513 = tpu.matmul %512, %11, %cst_174 {dimension_numbers = #tpu.dot_dimension_numbers<[1], [0], [0], [1], [0, 0, 1, 1], [], []>} : vector<8x32xbf16>, vector<32x128xbf16>, vector<8x128xf32> -> vector<8x128xf32>
    %514 = arith.addf %511, %513 : vector<8x128xf32>
    %515 = vector.extract_strided_slice %514 {offsets = [0, 0], sizes = [8, 32], strides = [1, 1]} : vector<8x128xf32> to vector<8x32xf32>
    %cst_175 = arith.constant 5.000000e-01 : f32
    %516 = vector.broadcast %cst_175 : f32 to vector<8x32xf32>
    %517 = arith.mulf %516, %515 : vector<8x32xf32>
    %518 = math.tanh %517 : vector<8x32xf32>
    %cst_176 = arith.constant 5.000000e-01 : f32
    %519 = vector.broadcast %cst_176 : f32 to vector<8x32xf32>
    %520 = arith.mulf %519, %518 : vector<8x32xf32>
    %cst_177 = arith.constant 5.000000e-01 : f32
    %521 = vector.broadcast %cst_177 : f32 to vector<8x32xf32>
    %522 = arith.addf %520, %521 : vector<8x32xf32>
    %523 = vector.extract_strided_slice %514 {offsets = [0, 32], sizes = [8, 32], strides = [1, 1]} : vector<8x128xf32> to vector<8x32xf32>
    %cst_178 = arith.constant 5.000000e-01 : f32
    %524 = vector.broadcast %cst_178 : f32 to vector<8x32xf32>
    %525 = arith.mulf %524, %523 : vector<8x32xf32>
    %526 = math.tanh %525 : vector<8x32xf32>
    %cst_179 = arith.constant 5.000000e-01 : f32
    %527 = vector.broadcast %cst_179 : f32 to vector<8x32xf32>
    %528 = arith.mulf %527, %526 : vector<8x32xf32>
    %cst_180 = arith.constant 5.000000e-01 : f32
    %529 = vector.broadcast %cst_180 : f32 to vector<8x32xf32>
    %530 = arith.addf %528, %529 : vector<8x32xf32>
    %531 = vector.extract_strided_slice %514 {offsets = [0, 64], sizes = [8, 32], strides = [1, 1]} : vector<8x128xf32> to vector<8x32xf32>
    %532 = math.tanh %531 : vector<8x32xf32>
    %533 = vector.extract_strided_slice %514 {offsets = [0, 96], sizes = [8, 32], strides = [1, 1]} : vector<8x128xf32> to vector<8x32xf32>
    %cst_181 = arith.constant 5.000000e-01 : f32
    %534 = vector.broadcast %cst_181 : f32 to vector<8x32xf32>
    %535 = arith.mulf %534, %533 : vector<8x32xf32>
    %536 = math.tanh %535 : vector<8x32xf32>
    %cst_182 = arith.constant 5.000000e-01 : f32
    %537 = vector.broadcast %cst_182 : f32 to vector<8x32xf32>
    %538 = arith.mulf %537, %536 : vector<8x32xf32>
    %cst_183 = arith.constant 5.000000e-01 : f32
    %539 = vector.broadcast %cst_183 : f32 to vector<8x32xf32>
    %540 = arith.addf %538, %539 : vector<8x32xf32>
    %541 = arith.mulf %530, %505 : vector<8x32xf32>
    %542 = arith.mulf %522, %532 : vector<8x32xf32>
    %543 = arith.addf %541, %542 : vector<8x32xf32>
    %544 = math.tanh %543 : vector<8x32xf32>
    %545 = arith.mulf %540, %544 : vector<8x32xf32>
    %c14_i32 = arith.constant 14 : i32
    %c8_i32_184 = arith.constant 8 : i32
    %546 = arith.muli %c14_i32, %c8_i32_184 : i32
    %547 = tpu.assume_multiple %546, 8 : i32
    %548 = arith.index_cast %547 : i32 to index
    %c0_185 = arith.constant 0 : index
    %549 = vector.load %arg11[%548, %c0_185] : memref<128x128xf32, #tpu.memory_space<vmem>>, vector<8x128xf32>
    %550 = arith.truncf %545 : vector<8x32xf32> to vector<8x32xbf16>
    %cst_186 = arith.constant dense<0.000000e+00> : vector<8x128xf32>
    %551 = tpu.matmul %550, %11, %cst_186 {dimension_numbers = #tpu.dot_dimension_numbers<[1], [0], [0], [1], [0, 0, 1, 1], [], []>} : vector<8x32xbf16>, vector<32x128xbf16>, vector<8x128xf32> -> vector<8x128xf32>
    %552 = arith.addf %549, %551 : vector<8x128xf32>
    %553 = vector.extract_strided_slice %552 {offsets = [0, 0], sizes = [8, 32], strides = [1, 1]} : vector<8x128xf32> to vector<8x32xf32>
    %cst_187 = arith.constant 5.000000e-01 : f32
    %554 = vector.broadcast %cst_187 : f32 to vector<8x32xf32>
    %555 = arith.mulf %554, %553 : vector<8x32xf32>
    %556 = math.tanh %555 : vector<8x32xf32>
    %cst_188 = arith.constant 5.000000e-01 : f32
    %557 = vector.broadcast %cst_188 : f32 to vector<8x32xf32>
    %558 = arith.mulf %557, %556 : vector<8x32xf32>
    %cst_189 = arith.constant 5.000000e-01 : f32
    %559 = vector.broadcast %cst_189 : f32 to vector<8x32xf32>
    %560 = arith.addf %558, %559 : vector<8x32xf32>
    %561 = vector.extract_strided_slice %552 {offsets = [0, 32], sizes = [8, 32], strides = [1, 1]} : vector<8x128xf32> to vector<8x32xf32>
    %cst_190 = arith.constant 5.000000e-01 : f32
    %562 = vector.broadcast %cst_190 : f32 to vector<8x32xf32>
    %563 = arith.mulf %562, %561 : vector<8x32xf32>
    %564 = math.tanh %563 : vector<8x32xf32>
    %cst_191 = arith.constant 5.000000e-01 : f32
    %565 = vector.broadcast %cst_191 : f32 to vector<8x32xf32>
    %566 = arith.mulf %565, %564 : vector<8x32xf32>
    %cst_192 = arith.constant 5.000000e-01 : f32
    %567 = vector.broadcast %cst_192 : f32 to vector<8x32xf32>
    %568 = arith.addf %566, %567 : vector<8x32xf32>
    %569 = vector.extract_strided_slice %552 {offsets = [0, 64], sizes = [8, 32], strides = [1, 1]} : vector<8x128xf32> to vector<8x32xf32>
    %570 = math.tanh %569 : vector<8x32xf32>
    %571 = vector.extract_strided_slice %552 {offsets = [0, 96], sizes = [8, 32], strides = [1, 1]} : vector<8x128xf32> to vector<8x32xf32>
    %cst_193 = arith.constant 5.000000e-01 : f32
    %572 = vector.broadcast %cst_193 : f32 to vector<8x32xf32>
    %573 = arith.mulf %572, %571 : vector<8x32xf32>
    %574 = math.tanh %573 : vector<8x32xf32>
    %cst_194 = arith.constant 5.000000e-01 : f32
    %575 = vector.broadcast %cst_194 : f32 to vector<8x32xf32>
    %576 = arith.mulf %575, %574 : vector<8x32xf32>
    %cst_195 = arith.constant 5.000000e-01 : f32
    %577 = vector.broadcast %cst_195 : f32 to vector<8x32xf32>
    %578 = arith.addf %576, %577 : vector<8x32xf32>
    %579 = arith.mulf %568, %543 : vector<8x32xf32>
    %580 = arith.mulf %560, %570 : vector<8x32xf32>
    %581 = arith.addf %579, %580 : vector<8x32xf32>
    %582 = math.tanh %581 : vector<8x32xf32>
    %583 = arith.mulf %578, %582 : vector<8x32xf32>
    %c15_i32 = arith.constant 15 : i32
    %c8_i32_196 = arith.constant 8 : i32
    %584 = arith.muli %c15_i32, %c8_i32_196 : i32
    %585 = tpu.assume_multiple %584, 8 : i32
    %586 = arith.index_cast %585 : i32 to index
    %c0_197 = arith.constant 0 : index
    %587 = vector.load %arg11[%586, %c0_197] : memref<128x128xf32, #tpu.memory_space<vmem>>, vector<8x128xf32>
    %588 = arith.truncf %583 : vector<8x32xf32> to vector<8x32xbf16>
    %cst_198 = arith.constant dense<0.000000e+00> : vector<8x128xf32>
    %589 = tpu.matmul %588, %11, %cst_198 {dimension_numbers = #tpu.dot_dimension_numbers<[1], [0], [0], [1], [0, 0, 1, 1], [], []>} : vector<8x32xbf16>, vector<32x128xbf16>, vector<8x128xf32> -> vector<8x128xf32>
    %590 = arith.addf %587, %589 : vector<8x128xf32>
    %591 = vector.extract_strided_slice %590 {offsets = [0, 0], sizes = [8, 32], strides = [1, 1]} : vector<8x128xf32> to vector<8x32xf32>
    %cst_199 = arith.constant 5.000000e-01 : f32
    %592 = vector.broadcast %cst_199 : f32 to vector<8x32xf32>
    %593 = arith.mulf %592, %591 : vector<8x32xf32>
    %594 = math.tanh %593 : vector<8x32xf32>
    %cst_200 = arith.constant 5.000000e-01 : f32
    %595 = vector.broadcast %cst_200 : f32 to vector<8x32xf32>
    %596 = arith.mulf %595, %594 : vector<8x32xf32>
    %cst_201 = arith.constant 5.000000e-01 : f32
    %597 = vector.broadcast %cst_201 : f32 to vector<8x32xf32>
    %598 = arith.addf %596, %597 : vector<8x32xf32>
    %599 = vector.extract_strided_slice %590 {offsets = [0, 32], sizes = [8, 32], strides = [1, 1]} : vector<8x128xf32> to vector<8x32xf32>
    %cst_202 = arith.constant 5.000000e-01 : f32
    %600 = vector.broadcast %cst_202 : f32 to vector<8x32xf32>
    %601 = arith.mulf %600, %599 : vector<8x32xf32>
    %602 = math.tanh %601 : vector<8x32xf32>
    %cst_203 = arith.constant 5.000000e-01 : f32
    %603 = vector.broadcast %cst_203 : f32 to vector<8x32xf32>
    %604 = arith.mulf %603, %602 : vector<8x32xf32>
    %cst_204 = arith.constant 5.000000e-01 : f32
    %605 = vector.broadcast %cst_204 : f32 to vector<8x32xf32>
    %606 = arith.addf %604, %605 : vector<8x32xf32>
    %607 = vector.extract_strided_slice %590 {offsets = [0, 64], sizes = [8, 32], strides = [1, 1]} : vector<8x128xf32> to vector<8x32xf32>
    %608 = math.tanh %607 : vector<8x32xf32>
    %609 = vector.extract_strided_slice %590 {offsets = [0, 96], sizes = [8, 32], strides = [1, 1]} : vector<8x128xf32> to vector<8x32xf32>
    %cst_205 = arith.constant 5.000000e-01 : f32
    %610 = vector.broadcast %cst_205 : f32 to vector<8x32xf32>
    %611 = arith.mulf %610, %609 : vector<8x32xf32>
    %612 = math.tanh %611 : vector<8x32xf32>
    %cst_206 = arith.constant 5.000000e-01 : f32
    %613 = vector.broadcast %cst_206 : f32 to vector<8x32xf32>
    %614 = arith.mulf %613, %612 : vector<8x32xf32>
    %cst_207 = arith.constant 5.000000e-01 : f32
    %615 = vector.broadcast %cst_207 : f32 to vector<8x32xf32>
    %616 = arith.addf %614, %615 : vector<8x32xf32>
    %617 = arith.mulf %606, %581 : vector<8x32xf32>
    %618 = arith.mulf %598, %608 : vector<8x32xf32>
    %619 = arith.addf %617, %618 : vector<8x32xf32>
    %620 = math.tanh %619 : vector<8x32xf32>
    %621 = arith.mulf %616, %620 : vector<8x32xf32>
    %c16_i32 = arith.constant 16 : i32
    %c0_208 = arith.constant 0 : index
    %c0_209 = arith.constant 0 : index
    %622 = vector.load %arg9[%c0_208, %c0_209] : memref<8x32xf32, #tpu.memory_space<vmem>>, vector<8x32xf32>
    tpu.vector_store %arg9[%c0_208, %c0_209], %621 {strides = array<i32>} : memref<8x32xf32, #tpu.memory_space<vmem>>, vector<8x32xf32>,
    %c0_210 = arith.constant 0 : index
    %c0_211 = arith.constant 0 : index
    %623 = vector.load %arg10[%c0_210, %c0_211] : memref<8x32xf32, #tpu.memory_space<vmem>>, vector<8x32xf32>
    tpu.vector_store %arg10[%c0_210, %c0_211], %619 {strides = array<i32>} : memref<8x32xf32, #tpu.memory_space<vmem>>, vector<8x32xf32>,
    %c0_i32_212 = arith.constant 0 : i32
    %624 = arith.cmpi eq, %arg1, %c0_i32_212 : i32
    %625 = arith.extui %624 : i1 to i32
    %c0_i32_213 = arith.constant 0 : i32
    %626 = arith.cmpi ne, %625, %c0_i32_213 : i32
    scf.if %626 {
      %627 = arith.truncf %621 : vector<8x32xf32> to vector<8x32xbf16>
      %c0_214 = arith.constant 0 : index
      %c0_215 = arith.constant 0 : index
      %628 = vector.load %arg6[%c0_214, %c0_215] : memref<32x4xbf16, #tpu.memory_space<vmem>>, vector<32x4xbf16>
      %cst_216 = arith.constant dense<0.000000e+00> : vector<8x4xf32>
      %629 = tpu.matmul %627, %628, %cst_216 {dimension_numbers = #tpu.dot_dimension_numbers<[1], [0], [0], [1], [0, 0, 1, 1], [], []>} : vector<8x32xbf16>, vector<32x4xbf16>, vector<8x4xf32> -> vector<8x4xf32>
      %c0_217 = arith.constant 0 : index
      %c0_218 = arith.constant 0 : index
      %630 = vector.load %arg7[%c0_217, %c0_218] : memref<1x4xf32, #tpu.memory_space<vmem>>, vector<1x4xf32>
      %631 = vector.broadcast %630 : vector<1x4xf32> to vector<8x4xf32>
      %632 = arith.addf %629, %631 : vector<8x4xf32>
      %c0_219 = arith.constant 0 : index
      %c0_220 = arith.constant 0 : index
      %c0_221 = arith.constant 0 : index
      %633 = vector.load %arg8[%c0_219, %c0_220, %c0_221] : memref<1x8x4xf32, #tpu.memory_space<vmem>>, vector<1x8x4xf32>
      %634 = vector.shape_cast %633 : vector<1x8x4xf32> to vector<8x4xf32>
      %635 = vector.shape_cast %632 : vector<8x4xf32> to vector<1x8x4xf32>
      tpu.vector_store %arg8[%c0_219, %c0_220, %c0_221], %635 {strides = array<i32>} : memref<1x8x4xf32, #tpu.memory_space<vmem>>, vector<1x8x4xf32>,
    } else {
    }
    return
  }
  func.func @transform_0(%arg0: i32, %arg1: i32) -> (i32, i32, i32) {
    %c0_i32 = arith.constant 0 : i32
    %c0_i32_0 = arith.constant 0 : i32
    return %arg0, %arg1, %c0_i32 : i32, i32, i32
  }
  func.func @transform_1(%arg0: i32, %arg1: i32) -> (i32, i32) {
    %c0_i32 = arith.constant 0 : i32
    %c0_i32_0 = arith.constant 0 : i32
    %c0_i32_1 = arith.constant 0 : i32
    return %c0_i32, %c0_i32_0 : i32, i32
  }
  func.func @transform_2(%arg0: i32, %arg1: i32) -> (i32, i32) {
    %c0_i32 = arith.constant 0 : i32
    %c0_i32_0 = arith.constant 0 : i32
    %c0_i32_1 = arith.constant 0 : i32
    return %c0_i32, %c0_i32_0 : i32, i32
  }
  func.func @transform_3(%arg0: i32, %arg1: i32) -> (i32, i32) {
    %c0_i32 = arith.constant 0 : i32
    %c0_i32_0 = arith.constant 0 : i32
    %c0_i32_1 = arith.constant 0 : i32
    return %c0_i32, %c0_i32_0 : i32, i32
  }
  func.func @transform_4(%arg0: i32, %arg1: i32) -> (i32, i32) {
    %c0_i32 = arith.constant 0 : i32
    %c0_i32_0 = arith.constant 0 : i32
    %c0_i32_1 = arith.constant 0 : i32
    return %c0_i32, %c0_i32_0 : i32, i32
  }
  func.func @transform_5(%arg0: i32, %arg1: i32) -> (i32, i32) {
    %c0_i32 = arith.constant 0 : i32
    %c0_i32_0 = arith.constant 0 : i32
    %c0_i32_1 = arith.constant 0 : i32
    return %c0_i32, %c0_i32_0 : i32, i32
  }
  func.func @transform_6(%arg0: i32, %arg1: i32) -> (i32, i32, i32) {
    %c0_i32 = arith.constant 0 : i32
    %c0_i32_0 = arith.constant 0 : i32
    %c0_i32_1 = arith.constant 0 : i32
    return %arg0, %c0_i32, %c0_i32_0 : i32, i32, i32
  }
}

</mosaic_0001>

<llo_original>
// kernel: lstm_seq_forward.1
$region0: #{lstm_seq_forward.1}
  #allocation0 [shape = 'u32[]', space=smem, size = 0x4, offset = 0x4, fixed_abs, tag = 'smem constant byte address 0x4 - core index']
  #allocation1 [shape = 'u32[144,128]{1,0:T(1,128)}', space=vmem, size = 0x12000, scoped, tag = 'internal scratch']
  #allocation2 [shape = 'f32[8,32]{1,0:T(8,128)}', space=vmem, size = 0x1000, scoped, tag = 'scratch operand']
  #allocation3 [shape = 'f32[8,32]{1,0:T(8,128)}', space=vmem, size = 0x1000, scoped, tag = 'scratch operand']
  #allocation4 [shape = 'f32[128,128]{1,0:T(8,128)}', space=vmem, size = 0x10000, scoped, tag = 'scratch operand']
  %s0 = inlined_call_operand.vmem [shape: bf16[1,128,16], index: 0, kind: input, shape index: {}]
  %s1 = inlined_call_operand.vmem [shape: bf16[16,128], index: 1, kind: input, shape index: {}]
  %s2 = inlined_call_operand.vmem [shape: bf16[32,128], index: 2, kind: input, shape index: {}]
  %s3 = inlined_call_operand.vmem [shape: f32[1,128], index: 3, kind: input, shape index: {}]
  %s4 = inlined_call_operand.vmem [shape: bf16[32,4], index: 4, kind: input, shape index: {}]
  %s5 = inlined_call_operand.vmem [shape: f32[1,4], index: 5, kind: input, shape index: {}]
  %s6 = inlined_call_operand.vmem [shape: f32[1,8,4], index: 6, kind: output, shape index: {}]
  %s7 = sld [smem:[#allocation0]]
  $region42: #{lstm_seq_forward.1} parent=0
    _
  %s9 = ssub.s32 1, %s7
  %s10 = scalar_select 0, %s9, %s7
  // Predicated region
  $region2: #{lstm_seq_forward.1} parent=0 // pred_check
    _
  $region3: #{lstm_seq_forward.1} parent=0 // pred_check_branch
    %12 = sbr.rel (0) target = $region5
  $region4: #{lstm_seq_forward.1} parent=0 // pred_region
    _
  $region5: #{lstm_seq_forward.1} parent=0 // pred_fallthru
    _
  // Predicated region
  $region6: #{lstm_seq_forward.1} parent=0 // pred_check
    _
  $region7: #{lstm_seq_forward.1} parent=0 // pred_check_branch
    %14 = sbr.rel (0) target = $region9
  $region8: #{lstm_seq_forward.1} parent=0 // pred_region
    _
  $region9: #{lstm_seq_forward.1} parent=0 // pred_fallthru
    _
  // Predicated region
  $region10: #{lstm_seq_forward.1} parent=0 // pred_check
    _
  $region11: #{lstm_seq_forward.1} parent=0 // pred_check_branch
    %16 = sbr.rel (0) target = $region13
  $region12: #{lstm_seq_forward.1} parent=0 // pred_region
    _
  $region13: #{lstm_seq_forward.1} parent=0 // pred_fallthru
    _
  // Predicated region
  $region14: #{lstm_seq_forward.1} parent=0 // pred_check
    _
  $region15: #{lstm_seq_forward.1} parent=0 // pred_check_branch
    %18 = sbr.rel (0) target = $region17
  $region16: #{lstm_seq_forward.1} parent=0 // pred_region
    _
  $region17: #{lstm_seq_forward.1} parent=0 // pred_fallthru
    _
  // Predicated region
  $region18: #{lstm_seq_forward.1} parent=0 // pred_check
    _
  $region19: #{lstm_seq_forward.1} parent=0 // pred_check_branch
    %20 = sbr.rel (0) target = $region21
  $region20: #{lstm_seq_forward.1} parent=0 // pred_region
    _
  $region21: #{lstm_seq_forward.1} parent=0 // pred_fallthru
    _
  // Predicated region
  $region22: #{lstm_seq_forward.1} parent=0 // pred_check
    _
  $region23: #{lstm_seq_forward.1} parent=0 // pred_check_branch
    %22 = sbr.rel (0) target = $region25
  $region24: #{lstm_seq_forward.1} parent=0 // pred_region
    _
  $region25: #{lstm_seq_forward.1} parent=0 // pred_fallthru
    _
  %p24 = scmp.eq.s32.totalorder 0, 0
  // Predicated region
  $region26: #{lstm_seq_forward.1} parent=0 // pred_check
    %p25 = pneg %p24
  $region27: #{lstm_seq_forward.1} parent=0 // pred_check_branch
    %27 = sbr.rel (%p25) target = $region29
  $region28: #{lstm_seq_forward.1} parent=0 // pred_region
    %vm28 = vcmask 261120
    %29 = vst.msk [vmem:[#allocation2] sm:$0xff] %vm28, 0.0
    %30 = vst.msk [vmem:[#allocation3] sm:$0xff] %vm28, 0.0
  $region29: #{lstm_seq_forward.1} parent=0 // pred_fallthru
    _
  %v31 = vld [vmem:[%s0] sm:$0xf]
  %v32 = vld [vmem:[%s0 + $0x4] sm:$0xf]
  %v33 = vld [vmem:[%s0 + $0x8] sm:$0xf]
  %v34 = vld [vmem:[%s0 + $0xc] sm:$0xf]
  %v35 = vld [vmem:[%s0 + $0x10] sm:$0xf]
  %v36 = vld [vmem:[%s0 + $0x14] sm:$0xf]
  %v37 = vld [vmem:[%s0 + $0x18] sm:$0xf]
  %v38 = vld [vmem:[%s0 + $0x1c] sm:$0xf]
  %v39 = vld [vmem:[%s0 + $0x20] sm:$0xf]
  %v40 = vld [vmem:[%s0 + $0x24] sm:$0xf]
  %v41 = vld [vmem:[%s0 + $0x28] sm:$0xf]
  %v42 = vld [vmem:[%s0 + $0x2c] sm:$0xf]
  %v43 = vld [vmem:[%s0 + $0x30] sm:$0xf]
  %v44 = vld [vmem:[%s0 + $0x34] sm:$0xf]
  %v45 = vld [vmem:[%s0 + $0x38] sm:$0xf]
  %v46 = vld [vmem:[%s0 + $0x3c] sm:$0xf]
  %v47 = vld [vmem:[%s1] sm:$0xf]
  %v48 = vld [vmem:[%s1 + $0x4] sm:$0xf]
  %v49 = vld [vmem:[%s3] sm:$0x1]
  %v51 = vlaneseq
  %v52 = vshrl.u32 %v51, 7
  %v53 = vsub.s32 0, %v52
  %v54 = vrot.slane %v49, %v53
  %v72 = vunpack.c.l.b16 %v31
  %v73 = vunpack.c.l.b16 %v32
  %v74 = vunpack.c.l.b16 %v33
  %v75 = vunpack.c.l.b16 %v34
  %v76 = vunpack.c.l.b16 %v35
  %v77 = vunpack.c.l.b16 %v36
  %v78 = vunpack.c.l.b16 %v37
  %v79 = vunpack.c.l.b16 %v38
  %v80 = vunpack.c.l.b16 %v39
  %v81 = vunpack.c.l.b16 %v40
  %v82 = vunpack.c.l.b16 %v41
  %v83 = vunpack.c.l.b16 %v42
  %v84 = vunpack.c.l.b16 %v43
  %v85 = vunpack.c.l.b16 %v44
  %v86 = vunpack.c.l.b16 %v45
  %v87 = vunpack.c.l.b16 %v46
  %v88 = vpack.c.b16 %v73, %v72
  %v89 = vpack.c.b16 %v75, %v74
  %v90 = vpack.c.b16 %v77, %v76
  %v91 = vpack.c.b16 %v79, %v78
  %v92 = vpack.c.b16 %v81, %v80
  %v93 = vpack.c.b16 %v83, %v82
  %v94 = vpack.c.b16 %v85, %v84
  %v95 = vpack.c.b16 %v87, %v86
  %v98 = vunpack.c.l.b16 %v47
  %v99 = vunpack.c.l.b16 %v48
  %v100 = vpack.c.b16 %v99, %v98
  %vm102 = vcmask 130048
  %v104 = vsel %vm102, %v88, 0
  %v107 = vsel %vm102, %v89, 0
  %v110 = vsel %vm102, %v90, 0
  %v113 = vsel %vm102, %v91, 0
  %v116 = vsel %vm102, %v92, 0
  %v119 = vsel %vm102, %v93, 0
  %v122 = vsel %vm102, %v94, 0
  %v125 = vsel %vm102, %v95, 0
  %127 = vmatprep.subr.bf16.mxu0 0
  %128 = vmatpush1.bf16.msra.mxu0 %v100
  %129 = vmatprep.subr.bf16.mxu0 0
  %130 = vmatpush1.bf16.msra.mxu0 0
  %131 = vmatprep.subr.bf16.mxu0 0
  %132 = vmatpush1.bf16.msra.mxu0 0
  %133 = vmatprep.subr.bf16.mxu0 0
  %134 = vmatpush1.bf16.msra.mxu0 0
  %135 = vmatprep.subr.bf16.mxu0 0
  %136 = vmatpush1.bf16.msra.mxu0 0
  %137 = vmatprep.subr.bf16.mxu0 0
  %138 = vmatpush1.bf16.msra.mxu0 0
  %139 = vmatprep.subr.bf16.mxu0 0
  %140 = vmatpush1.bf16.msra.mxu0 0
  %141 = vmatprep.subr.bf16.mxu0 0
  %142 = vmatpush1.bf16.msra.mxu0 0
  %143 = vmatprep.subr.bf16.mxu0 0
  %144 = vmatpush1.bf16.msra.mxu0 0
  %145 = vmatprep.subr.bf16.mxu0 0
  %146 = vmatpush1.bf16.msra.mxu0 0
  %147 = vmatprep.subr.bf16.mxu0 0
  %148 = vmatpush1.bf16.msra.mxu0 0
  %149 = vmatprep.subr.bf16.mxu0 0
  %150 = vmatpush1.bf16.msra.mxu0 0
  %151 = vmatprep.subr.bf16.mxu0 0
  %152 = vmatpush1.bf16.msra.mxu0 0
  %153 = vmatprep.subr.bf16.mxu0 0
  %154 = vmatpush1.bf16.msra.mxu0 0
  %155 = vmatprep.subr.bf16.mxu0 0
  %156 = vmatpush1.bf16.msra.mxu0 0
  %157 = vmatprep.subr.bf16.mxu0 0
  %158 = vmatpush1.bf16.msra.mxu0 0
  %159 = vmatprep.mubr.bf16.mxu0 0
  %160 = vmatmul.mubr.bf16.gmra.mrb[0].mxu0 %v104
  %v161 = vpop.f32.mrb[0].mxu0
  %v162 = vadd.f32 %v54, %v161
  %v163 = vpop.f32.mrb[0].mxu0
  %v164 = vpop.f32.mrb[0].mxu0
  %v165 = vadd.f32 %v54, %v164
  %v166 = vpop.f32.mrb[0].mxu0
  %167 = vmatprep.mubr.bf16.mxu0 0
  %168 = vmatmul.mubr.bf16.gmra.mrb[0].mxu0 %v107
  %v169 = vpop.f32.mrb[0].mxu0
  %v170 = vadd.f32 %v54, %v169
  %v171 = vpop.f32.mrb[0].mxu0
  %v172 = vpop.f32.mrb[0].mxu0
  %v173 = vadd.f32 %v54, %v172
  %v174 = vpop.f32.mrb[0].mxu0
  %175 = vmatprep.mubr.bf16.mxu0 0
  %176 = vmatmul.mubr.bf16.gmra.mrb[0].mxu0 %v110
  %v177 = vpop.f32.mrb[0].mxu0
  %v178 = vadd.f32 %v54, %v177
  %v179 = vpop.f32.mrb[0].mxu0
  %v180 = vpop.f32.mrb[0].mxu0
  %v181 = vadd.f32 %v54, %v180
  %v182 = vpop.f32.mrb[0].mxu0
  %183 = vmatprep.mubr.bf16.mxu0 0
  %184 = vmatmul.mubr.bf16.gmra.mrb[0].mxu0 %v113
  %v185 = vpop.f32.mrb[0].mxu0
  %v186 = vadd.f32 %v54, %v185
  %v187 = vpop.f32.mrb[0].mxu0
  %v188 = vpop.f32.mrb[0].mxu0
  %v189 = vadd.f32 %v54, %v188
  %v190 = vpop.f32.mrb[0].mxu0
  %191 = vmatprep.mubr.bf16.mxu0 0
  %192 = vmatmul.mubr.bf16.gmra.mrb[0].mxu0 %v116
  %v193 = vpop.f32.mrb[0].mxu0
  %v194 = vadd.f32 %v54, %v193
  %v195 = vpop.f32.mrb[0].mxu0
  %v196 = vpop.f32.mrb[0].mxu0
  %v197 = vadd.f32 %v54, %v196
  %v198 = vpop.f32.mrb[0].mxu0
  %199 = vmatprep.mubr.bf16.mxu0 0
  %200 = vmatmul.mubr.bf16.gmra.mrb[0].mxu0 %v119
  %v201 = vpop.f32.mrb[0].mxu0
  %v202 = vadd.f32 %v54, %v201
  %v203 = vpop.f32.mrb[0].mxu0
  %v204 = vpop.f32.mrb[0].mxu0
  %v205 = vadd.f32 %v54, %v204
  %v206 = vpop.f32.mrb[0].mxu0
  %207 = vmatprep.mubr.bf16.mxu0 0
  %208 = vmatmul.mubr.bf16.gmra.mrb[0].mxu0 %v122
  %v209 = vpop.f32.mrb[0].mxu0
  %v210 = vadd.f32 %v54, %v209
  %v211 = vpop.f32.mrb[0].mxu0
  %v212 = vpop.f32.mrb[0].mxu0
  %v213 = vadd.f32 %v54, %v212
  %v214 = vpop.f32.mrb[0].mxu0
  %215 = vmatprep.mubr.bf16.mxu0 0
  %216 = vmatmul.mubr.bf16.gmra.mrb[0].mxu0 %v125
  %v217 = vpop.f32.mrb[0].mxu0
  %v218 = vadd.f32 %v54, %v217
  %v219 = vpop.f32.mrb[0].mxu0
  %v220 = vpop.f32.mrb[0].mxu0
  %v221 = vadd.f32 %v54, %v220
  %v222 = vpop.f32.mrb[0].mxu0
  %223 = vdwg.mxu0
  %224 = vst [vmem:[#allocation4] sm:$0xff] %v162
  %225 = vst [vmem:[#allocation4 + $0x8] sm:$0xff] %v165
  %226 = vst [vmem:[#allocation4 + $0x10] sm:$0xff] %v170
  %227 = vst [vmem:[#allocation4 + $0x18] sm:$0xff] %v173
  %228 = vst [vmem:[#allocation4 + $0x20] sm:$0xff] %v178
  %229 = vst [vmem:[#allocation4 + $0x28] sm:$0xff] %v181
  %230 = vst [vmem:[#allocation4 + $0x30] sm:$0xff] %v186
  %231 = vst [vmem:[#allocation4 + $0x38] sm:$0xff] %v189
  %232 = vst [vmem:[#allocation4 + $0x40] sm:$0xff] %v194
  %233 = vst [vmem:[#allocation4 + $0x48] sm:$0xff] %v197
  %234 = vst [vmem:[#allocation4 + $0x50] sm:$0xff] %v202
  %235 = vst [vmem:[#allocation4 + $0x58] sm:$0xff] %v205
  %236 = vst [vmem:[#allocation4 + $0x60] sm:$0xff] %v210
  %237 = vst [vmem:[#allocation4 + $0x68] sm:$0xff] %v213
  %238 = vst [vmem:[#allocation4 + $0x70] sm:$0xff] %v218
  %239 = vst [vmem:[#allocation4 + $0x78] sm:$0xff] %v221
  %v240 = vld [vmem:[%s2] sm:$0xf]
  %v241 = vld [vmem:[%s2 + $0x4] sm:$0xf]
  %v242 = vld [vmem:[%s2 + $0x8] sm:$0xf]
  %v243 = vld [vmem:[%s2 + $0xc] sm:$0xf]
  %v244 = vld [vmem:[#allocation2] sm:$0xff]
  %v245 = vld [vmem:[#allocation3] sm:$0xff]
  %v246 = vld [vmem:[#allocation4] sm:$0xff]
  %v247 = vpack.c.bf16 %v244, %v244
  %v252 = vunpack.c.l.b16 %v240
  %v253 = vunpack.c.l.b16 %v241
  %v254 = vunpack.c.l.b16 %v242
  %v255 = vunpack.c.l.b16 %v243
  %v256 = vpack.c.b16 %v253, %v252
  %v257 = vpack.c.b16 %v255, %v254
  %vm260 = vcmask 261120
  %v262 = vsel %vm260, %v247, 0
  %264 = vmatprep.subr.bf16.mxu0 0
  %265 = vmatpush1.bf16.msra.mxu0 %v256
  %266 = vmatprep.subr.bf16.mxu0 0
  %267 = vmatpush1.bf16.msra.mxu0 %v257
  %268 = vmatprep.subr.bf16.mxu0 0
  %269 = vmatpush1.bf16.msra.mxu0 0
  %270 = vmatprep.subr.bf16.mxu0 0
  %271 = vmatpush1.bf16.msra.mxu0 0
  %272 = vmatprep.subr.bf16.mxu0 0
  %273 = vmatpush1.bf16.msra.mxu0 0
  %274 = vmatprep.subr.bf16.mxu0 0
  %275 = vmatpush1.bf16.msra.mxu0 0
  %276 = vmatprep.subr.bf16.mxu0 0
  %277 = vmatpush1.bf16.msra.mxu0 0
  %278 = vmatprep.subr.bf16.mxu0 0
  %279 = vmatpush1.bf16.msra.mxu0 0
  %280 = vmatprep.subr.bf16.mxu0 0
  %281 = vmatpush1.bf16.msra.mxu0 0
  %282 = vmatprep.subr.bf16.mxu0 0
  %283 = vmatpush1.bf16.msra.mxu0 0
  %284 = vmatprep.subr.bf16.mxu0 0
  %285 = vmatpush1.bf16.msra.mxu0 0
  %286 = vmatprep.subr.bf16.mxu0 0
  %287 = vmatpush1.bf16.msra.mxu0 0
  %288 = vmatprep.subr.bf16.mxu0 0
  %289 = vmatpush1.bf16.msra.mxu0 0
  %290 = vmatprep.subr.bf16.mxu0 0
  %291 = vmatpush1.bf16.msra.mxu0 0
  %292 = vmatprep.subr.bf16.mxu0 0
  %293 = vmatpush1.bf16.msra.mxu0 0
  %294 = vmatprep.subr.bf16.mxu0 0
  %295 = vmatpush1.bf16.msra.mxu0 0
  %296 = vmatprep.mubr.bf16.mxu0 0
  %297 = vmatmul.mubr.bf16.gmra.mrb[0].mxu0 %v262
  %v298 = vpop.f32.mrb[0].mxu0
  %v299 = vadd.f32 0.0, %v298
  %v300 = vpop.f32.mrb[0].mxu0
  %v301 = vpop.f32.mrb[0].mxu0
  %v302 = vpop.f32.mrb[0].mxu0
  %303 = vdwg.mxu0
  %v304 = vadd.f32 %v246, %v299
  %v305 = vmul.f32 %v304, 0.5
  %v306 = vtanh.pop %v305
  %v307 = vmul.f32 %v306, 0.5
  %v308 = vadd.f32 %v307, 0.5
  %v309 = vtanh.pop %v304
  %311 = vrot.lane.b32.xlu0 %v245, 32
  %v312 = vpop.permute.xlu0 %311
  %v314 = vmul.f32 %v308, %v312
  %316 = vrot.lane.b32.xlu0 %v309, 64
  %v317 = vpop.permute.xlu0 %316
  %v319 = vmul.f32 %v308, %v317
  %321 = vrot.lane.b32.xlu0 %v319, 32
  %v322 = vpop.permute.xlu0 %321
  %v324 = vadd.f32 %v314, %v322
  %v325 = vtanh.pop %v324
  %327 = vrot.lane.b32.xlu0 %v325, 64
  %v328 = vpop.permute.xlu0 %327
  %v330 = vmul.f32 %v308, %v328
  %s331 = scalar_lea.vmem [#allocation4], 8
  %v332 = vld [vmem:[%s331] sm:$0xff]
  %v333 = vpack.c.bf16 %v330, %v330
  %335 = vrot.lane.b32.xlu0 %v333, 32
  %v336 = vpop.permute.xlu0 %335
  %v338 = vsel %vm260, %v336, 0
  %340 = vmatprep.subr.bf16.mxu0 0
  %341 = vmatpush1.bf16.msra.mxu0 %v256
  %342 = vmatprep.subr.bf16.mxu0 0
  %343 = vmatpush1.bf16.msra.mxu0 %v257
  %344 = vmatprep.subr.bf16.mxu0 0
  %345 = vmatpush1.bf16.msra.mxu0 0
  %346 = vmatprep.subr.bf16.mxu0 0
  %347 = vmatpush1.bf16.msra.mxu0 0
  %348 = vmatprep.subr.bf16.mxu0 0
  %349 = vmatpush1.bf16.msra.mxu0 0
  %350 = vmatprep.subr.bf16.mxu0 0
  %351 = vmatpush1.bf16.msra.mxu0 0
  %352 = vmatprep.subr.bf16.mxu0 0
  %353 = vmatpush1.bf16.msra.mxu0 0
  %354 = vmatprep.subr.bf16.mxu0 0
  %355 = vmatpush1.bf16.msra.mxu0 0
  %356 = vmatprep.subr.bf16.mxu0 0
  %357 = vmatpush1.bf16.msra.mxu0 0
  %358 = vmatprep.subr.bf16.mxu0 0
  %359 = vmatpush1.bf16.msra.mxu0 0
  %360 = vmatprep.subr.bf16.mxu0 0
  %361 = vmatpush1.bf16.msra.mxu0 0
  %362 = vmatprep.subr.bf16.mxu0 0
  %363 = vmatpush1.bf16.msra.mxu0 0
  %364 = vmatprep.subr.bf16.mxu0 0
  %365 = vmatpush1.bf16.msra.mxu0 0
  %366 = vmatprep.subr.bf16.mxu0 0
  %367 = vmatpush1.bf16.msra.mxu0 0
  %368 = vmatprep.subr.bf16.mxu0 0
  %369 = vmatpush1.bf16.msra.mxu0 0
  %370 = vmatprep.subr.bf16.mxu0 0
  %371 = vmatpush1.bf16.msra.mxu0 0
  %372 = vmatprep.mubr.bf16.mxu0 0
  %373 = vmatmul.mubr.bf16.gmra.mrb[0].mxu0 %v338
  %v374 = vpop.f32.mrb[0].mxu0
  %v375 = vadd.f32 0.0, %v374
  %v376 = vpop.f32.mrb[0].mxu0
  %v377 = vpop.f32.mrb[0].mxu0
  %v378 = vpop.f32.mrb[0].mxu0
  %379 = vdwg.mxu0
  %v380 = vadd.f32 %v332, %v375
  %v381 = vmul.f32 %v380, 0.5
  %v382 = vtanh.pop %v381
  %v383 = vmul.f32 %v382, 0.5
  %v384 = vadd.f32 %v383, 0.5
  %v385 = vtanh.pop %v380
  %v386 = vmul.f32 %v384, %v324
  %388 = vrot.lane.b32.xlu0 %v385, 64
  %v389 = vpop.permute.xlu0 %388
  %v391 = vmul.f32 %v384, %v389
  %393 = vrot.lane.b32.xlu0 %v391, 32
  %v394 = vpop.permute.xlu0 %393
  %v396 = vadd.f32 %v386, %v394
  %v397 = vtanh.pop %v396
  %399 = vrot.lane.b32.xlu0 %v397, 64
  %v400 = vpop.permute.xlu0 %399
  %v402 = vmul.f32 %v384, %v400
  %s403 = scalar_lea.vmem [#allocation4], 16
  %v404 = vld [vmem:[%s403] sm:$0xff]
  %v405 = vpack.c.bf16 %v402, %v402
  %407 = vrot.lane.b32.xlu0 %v405, 32
  %v408 = vpop.permute.xlu0 %407
  %v410 = vsel %vm260, %v408, 0
  %412 = vmatprep.subr.bf16.mxu0 0
  %413 = vmatpush1.bf16.msra.mxu0 %v256
  %414 = vmatprep.subr.bf16.mxu0 0
  %415 = vmatpush1.bf16.msra.mxu0 %v257
  %416 = vmatprep.subr.bf16.mxu0 0
  %417 = vmatpush1.bf16.msra.mxu0 0
  %418 = vmatprep.subr.bf16.mxu0 0
  %419 = vmatpush1.bf16.msra.mxu0 0
  %420 = vmatprep.subr.bf16.mxu0 0
  %421 = vmatpush1.bf16.msra.mxu0 0
  %422 = vmatprep.subr.bf16.mxu0 0
  %423 = vmatpush1.bf16.msra.mxu0 0
  %424 = vmatprep.subr.bf16.mxu0 0
  %425 = vmatpush1.bf16.msra.mxu0 0
  %426 = vmatprep.subr.bf16.mxu0 0
  %427 = vmatpush1.bf16.msra.mxu0 0
  %428 = vmatprep.subr.bf16.mxu0 0
  %429 = vmatpush1.bf16.msra.mxu0 0
  %430 = vmatprep.subr.bf16.mxu0 0
  %431 = vmatpush1.bf16.msra.mxu0 0
  %432 = vmatprep.subr.bf16.mxu0 0
  %433 = vmatpush1.bf16.msra.mxu0 0
  %434 = vmatprep.subr.bf16.mxu0 0
  %435 = vmatpush1.bf16.msra.mxu0 0
  %436 = vmatprep.subr.bf16.mxu0 0
  %437 = vmatpush1.bf16.msra.mxu0 0
  %438 = vmatprep.subr.bf16.mxu0 0
  %439 = vmatpush1.bf16.msra.mxu0 0
  %440 = vmatprep.subr.bf16.mxu0 0
  %441 = vmatpush1.bf16.msra.mxu0 0
  %442 = vmatprep.subr.bf16.mxu0 0
  %443 = vmatpush1.bf16.msra.mxu0 0
  %444 = vmatprep.mubr.bf16.mxu0 0
  %445 = vmatmul.mubr.bf16.gmra.mrb[0].mxu0 %v410
  %v446 = vpop.f32.mrb[0].mxu0
  %v447 = vadd.f32 0.0, %v446
  %v448 = vpop.f32.mrb[0].mxu0
  %v449 = vpop.f32.mrb[0].mxu0
  %v450 = vpop.f32.mrb[0].mxu0
  %451 = vdwg.mxu0
  %v452 = vadd.f32 %v404, %v447
  %v453 = vmul.f32 %v452, 0.5
  %v454 = vtanh.pop %v453
  %v455 = vmul.f32 %v454, 0.5
  %v456 = vadd.f32 %v455, 0.5
  %v457 = vtanh.pop %v452
  %v458 = vmul.f32 %v456, %v396
  %460 = vrot.lane.b32.xlu0 %v457, 64
  %v461 = vpop.permute.xlu0 %460
  %v463 = vmul.f32 %v456, %v461
  %465 = vrot.lane.b32.xlu0 %v463, 32
  %v466 = vpop.permute.xlu0 %465
  %v468 = vadd.f32 %v458, %v466
  %v469 = vtanh.pop %v468
  %471 = vrot.lane.b32.xlu0 %v469, 64
  %v472 = vpop.permute.xlu0 %471
  %v474 = vmul.f32 %v456, %v472
  %s475 = scalar_lea.vmem [#allocation4], 24
  %v476 = vld [vmem:[%s475] sm:$0xff]
  %v477 = vpack.c.bf16 %v474, %v474
  %479 = vrot.lane.b32.xlu0 %v477, 32
  %v480 = vpop.permute.xlu0 %479
  %v482 = vsel %vm260, %v480, 0
  %484 = vmatprep.subr.bf16.mxu0 0
  %485 = vmatpush1.bf16.msra.mxu0 %v256
  %486 = vmatprep.subr.bf16.mxu0 0
  %487 = vmatpush1.bf16.msra.mxu0 %v257
  %488 = vmatprep.subr.bf16.mxu0 0
  %489 = vmatpush1.bf16.msra.mxu0 0
  %490 = vmatprep.subr.bf16.mxu0 0
  %491 = vmatpush1.bf16.msra.mxu0 0
  %492 = vmatprep.subr.bf16.mxu0 0
  %493 = vmatpush1.bf16.msra.mxu0 0
  %494 = vmatprep.subr.bf16.mxu0 0
  %495 = vmatpush1.bf16.msra.mxu0 0
  %496 = vmatprep.subr.bf16.mxu0 0
  %497 = vmatpush1.bf16.msra.mxu0 0
  %498 = vmatprep.subr.bf16.mxu0 0
  %499 = vmatpush1.bf16.msra.mxu0 0
  %500 = vmatprep.subr.bf16.mxu0 0
  %501 = vmatpush1.bf16.msra.mxu0 0
  %502 = vmatprep.subr.bf16.mxu0 0
  %503 = vmatpush1.bf16.msra.mxu0 0
  %504 = vmatprep.subr.bf16.mxu0 0
  %505 = vmatpush1.bf16.msra.mxu0 0
  %506 = vmatprep.subr.bf16.mxu0 0
  %507 = vmatpush1.bf16.msra.mxu0 0
  %508 = vmatprep.subr.bf16.mxu0 0
  %509 = vmatpush1.bf16.msra.mxu0 0
  %510 = vmatprep.subr.bf16.mxu0 0
  %511 = vmatpush1.bf16.msra.mxu0 0
  %512 = vmatprep.subr.bf16.mxu0 0
  %513 = vmatpush1.bf16.msra.mxu0 0
  %514 = vmatprep.subr.bf16.mxu0 0
  %515 = vmatpush1.bf16.msra.mxu0 0
  %516 = vmatprep.mubr.bf16.mxu0 0
  %517 = vmatmul.mubr.bf16.gmra.mrb[0].mxu0 %v482
  %v518 = vpop.f32.mrb[0].mxu0
  %v519 = vadd.f32 0.0, %v518
  %v520 = vpop.f32.mrb[0].mxu0
  %v521 = vpop.f32.mrb[0].mxu0
  %v522 = vpop.f32.mrb[0].mxu0
  %523 = vdwg.mxu0
  %v524 = vadd.f32 %v476, %v519
  %v525 = vmul.f32 %v524, 0.5
  %v526 = vtanh.pop %v525
  %v527 = vmul.f32 %v526, 0.5
  %v528 = vadd.f32 %v527, 0.5
  %v529 = vtanh.pop %v524
  %v530 = vmul.f32 %v528, %v468
  %532 = vrot.lane.b32.xlu0 %v529, 64
  %v533 = vpop.permute.xlu0 %532
  %v535 = vmul.f32 %v528, %v533
  %537 = vrot.lane.b32.xlu0 %v535, 32
  %v538 = vpop.permute.xlu0 %537
  %v540 = vadd.f32 %v530, %v538
  %v541 = vtanh.pop %v540
  %543 = vrot.lane.b32.xlu0 %v541, 64
  %v544 = vpop.permute.xlu0 %543
  %v546 = vmul.f32 %v528, %v544
  %s547 = scalar_lea.vmem [#allocation4], 32
  %v548 = vld [vmem:[%s547] sm:$0xff]
  %v549 = vpack.c.bf16 %v546, %v546
  %551 = vrot.lane.b32.xlu0 %v549, 32
  %v552 = vpop.permute.xlu0 %551
  %v554 = vsel %vm260, %v552, 0
  %556 = vmatprep.subr.bf16.mxu0 0
  %557 = vmatpush1.bf16.msra.mxu0 %v256
  %558 = vmatprep.subr.bf16.mxu0 0
  %559 = vmatpush1.bf16.msra.mxu0 %v257
  %560 = vmatprep.subr.bf16.mxu0 0
  %561 = vmatpush1.bf16.msra.mxu0 0
  %562 = vmatprep.subr.bf16.mxu0 0
  %563 = vmatpush1.bf16.msra.mxu0 0
  %564 = vmatprep.subr.bf16.mxu0 0
  %565 = vmatpush1.bf16.msra.mxu0 0
  %566 = vmatprep.subr.bf16.mxu0 0
  %567 = vmatpush1.bf16.msra.mxu0 0
  %568 = vmatprep.subr.bf16.mxu0 0
  %569 = vmatpush1.bf16.msra.mxu0 0
  %570 = vmatprep.subr.bf16.mxu0 0
  %571 = vmatpush1.bf16.msra.mxu0 0
  %572 = vmatprep.subr.bf16.mxu0 0
  %573 = vmatpush1.bf16.msra.mxu0 0
  %574 = vmatprep.subr.bf16.mxu0 0
  %575 = vmatpush1.bf16.msra.mxu0 0
  %576 = vmatprep.subr.bf16.mxu0 0
  %577 = vmatpush1.bf16.msra.mxu0 0
  %578 = vmatprep.subr.bf16.mxu0 0
  %579 = vmatpush1.bf16.msra.mxu0 0
  %580 = vmatprep.subr.bf16.mxu0 0
  %581 = vmatpush1.bf16.msra.mxu0 0
  %582 = vmatprep.subr.bf16.mxu0 0
  %583 = vmatpush1.bf16.msra.mxu0 0
  %584 = vmatprep.subr.bf16.mxu0 0
  %585 = vmatpush1.bf16.msra.mxu0 0
  %586 = vmatprep.subr.bf16.mxu0 0
  %587 = vmatpush1.bf16.msra.mxu0 0
  %588 = vmatprep.mubr.bf16.mxu0 0
  %589 = vmatmul.mubr.bf16.gmra.mrb[0].mxu0 %v554
  %v590 = vpop.f32.mrb[0].mxu0
  %v591 = vadd.f32 0.0, %v590
  %v592 = vpop.f32.mrb[0].mxu0
  %v593 = vpop.f32.mrb[0].mxu0
  %v594 = vpop.f32.mrb[0].mxu0
  %595 = vdwg.mxu0
  %v596 = vadd.f32 %v548, %v591
  %v597 = vmul.f32 %v596, 0.5
  %v598 = vtanh.pop %v597
  %v599 = vmul.f32 %v598, 0.5
  %v600 = vadd.f32 %v599, 0.5
  %v601 = vtanh.pop %v596
  %v602 = vmul.f32 %v600, %v540
  %604 = vrot.lane.b32.xlu0 %v601, 64
  %v605 = vpop.permute.xlu0 %604
  %v607 = vmul.f32 %v600, %v605
  %609 = vrot.lane.b32.xlu0 %v607, 32
  %v610 = vpop.permute.xlu0 %609
  %v612 = vadd.f32 %v602, %v610
  %v613 = vtanh.pop %v612
  %615 = vrot.lane.b32.xlu0 %v613, 64
  %v616 = vpop.permute.xlu0 %615
  %v618 = vmul.f32 %v600, %v616
  %s619 = scalar_lea.vmem [#allocation4], 40
  %v620 = vld [vmem:[%s619] sm:$0xff]
  %v621 = vpack.c.bf16 %v618, %v618
  %623 = vrot.lane.b32.xlu0 %v621, 32
  %v624 = vpop.permute.xlu0 %623
  %v626 = vsel %vm260, %v624, 0
  %628 = vmatprep.subr.bf16.mxu0 0
  %629 = vmatpush1.bf16.msra.mxu0 %v256
  %630 = vmatprep.subr.bf16.mxu0 0
  %631 = vmatpush1.bf16.msra.mxu0 %v257
  %632 = vmatprep.subr.bf16.mxu0 0
  %633 = vmatpush1.bf16.msra.mxu0 0
  %634 = vmatprep.subr.bf16.mxu0 0
  %635 = vmatpush1.bf16.msra.mxu0 0
  %636 = vmatprep.subr.bf16.mxu0 0
  %637 = vmatpush1.bf16.msra.mxu0 0
  %638 = vmatprep.subr.bf16.mxu0 0
  %639 = vmatpush1.bf16.msra.mxu0 0
  %640 = vmatprep.subr.bf16.mxu0 0
  %641 = vmatpush1.bf16.msra.mxu0 0
  %642 = vmatprep.subr.bf16.mxu0 0
  %643 = vmatpush1.bf16.msra.mxu0 0
  %644 = vmatprep.subr.bf16.mxu0 0
  %645 = vmatpush1.bf16.msra.mxu0 0
  %646 = vmatprep.subr.bf16.mxu0 0
  %647 = vmatpush1.bf16.msra.mxu0 0
  %648 = vmatprep.subr.bf16.mxu0 0
  %649 = vmatpush1.bf16.msra.mxu0 0
  %650 = vmatprep.subr.bf16.mxu0 0
  %651 = vmatpush1.bf16.msra.mxu0 0
  %652 = vmatprep.subr.bf16.mxu0 0
  %653 = vmatpush1.bf16.msra.mxu0 0
  %654 = vmatprep.subr.bf16.mxu0 0
  %655 = vmatpush1.bf16.msra.mxu0 0
  %656 = vmatprep.subr.bf16.mxu0 0
  %657 = vmatpush1.bf16.msra.mxu0 0
  %658 = vmatprep.subr.bf16.mxu0 0
  %659 = vmatpush1.bf16.msra.mxu0 0
  %660 = vmatprep.mubr.bf16.mxu0 0
  %661 = vmatmul.mubr.bf16.gmra.mrb[0].mxu0 %v626
  %v662 = vpop.f32.mrb[0].mxu0
  %v663 = vadd.f32 0.0, %v662
  %v664 = vpop.f32.mrb[0].mxu0
  %v665 = vpop.f32.mrb[0].mxu0
  %v666 = vpop.f32.mrb[0].mxu0
  %667 = vdwg.mxu0
  %v668 = vadd.f32 %v620, %v663
  %v669 = vmul.f32 %v668, 0.5
  %v670 = vtanh.pop %v669
  %v671 = vmul.f32 %v670, 0.5
  %v672 = vadd.f32 %v671, 0.5
  %v673 = vtanh.pop %v668
  %v674 = vmul.f32 %v672, %v612
  %676 = vrot.lane.b32.xlu0 %v673, 64
  %v677 = vpop.permute.xlu0 %676
  %v679 = vmul.f32 %v672, %v677
  %681 = vrot.lane.b32.xlu0 %v679, 32
  %v682 = vpop.permute.xlu0 %681
  %v684 = vadd.f32 %v674, %v682
  %v685 = vtanh.pop %v684
  %687 = vrot.lane.b32.xlu0 %v685, 64
  %v688 = vpop.permute.xlu0 %687
  %v690 = vmul.f32 %v672, %v688
  %s691 = scalar_lea.vmem [#allocation4], 48
  %v692 = vld [vmem:[%s691] sm:$0xff]
  %v693 = vpack.c.bf16 %v690, %v690
  %695 = vrot.lane.b32.xlu0 %v693, 32
  %v696 = vpop.permute.xlu0 %695
  %v698 = vsel %vm260, %v696, 0
  %700 = vmatprep.subr.bf16.mxu0 0
  %701 = vmatpush1.bf16.msra.mxu0 %v256
  %702 = vmatprep.subr.bf16.mxu0 0
  %703 = vmatpush1.bf16.msra.mxu0 %v257
  %704 = vmatprep.subr.bf16.mxu0 0
  %705 = vmatpush1.bf16.msra.mxu0 0
  %706 = vmatprep.subr.bf16.mxu0 0
  %707 = vmatpush1.bf16.msra.mxu0 0
  %708 = vmatprep.subr.bf16.mxu0 0
  %709 = vmatpush1.bf16.msra.mxu0 0
  %710 = vmatprep.subr.bf16.mxu0 0
  %711 = vmatpush1.bf16.msra.mxu0 0
  %712 = vmatprep.subr.bf16.mxu0 0
  %713 = vmatpush1.bf16.msra.mxu0 0
  %714 = vmatprep.subr.bf16.mxu0 0
  %715 = vmatpush1.bf16.msra.mxu0 0
  %716 = vmatprep.subr.bf16.mxu0 0
  %717 = vmatpush1.bf16.msra.mxu0 0
  %718 = vmatprep.subr.bf16.mxu0 0
  %719 = vmatpush1.bf16.msra.mxu0 0
  %720 = vmatprep.subr.bf16.mxu0 0
  %721 = vmatpush1.bf16.msra.mxu0 0
  %722 = vmatprep.subr.bf16.mxu0 0
  %723 = vmatpush1.bf16.msra.mxu0 0
  %724 = vmatprep.subr.bf16.mxu0 0
  %725 = vmatpush1.bf16.msra.mxu0 0
  %726 = vmatprep.subr.bf16.mxu0 0
  %727 = vmatpush1.bf16.msra.mxu0 0
  %728 = vmatprep.subr.bf16.mxu0 0
  %729 = vmatpush1.bf16.msra.mxu0 0
  %730 = vmatprep.subr.bf16.mxu0 0
  %731 = vmatpush1.bf16.msra.mxu0 0
  %732 = vmatprep.mubr.bf16.mxu0 0
  %733 = vmatmul.mubr.bf16.gmra.mrb[0].mxu0 %v698
  %v734 = vpop.f32.mrb[0].mxu0
  %v735 = vadd.f32 0.0, %v734
  %v736 = vpop.f32.mrb[0].mxu0
  %v737 = vpop.f32.mrb[0].mxu0
  %v738 = vpop.f32.mrb[0].mxu0
  %739 = vdwg.mxu0
  %v740 = vadd.f32 %v692, %v735
  %v741 = vmul.f32 %v740, 0.5
  %v742 = vtanh.pop %v741
  %v743 = vmul.f32 %v742, 0.5
  %v744 = vadd.f32 %v743, 0.5
  %v745 = vtanh.pop %v740
  %v746 = vmul.f32 %v744, %v684
  %748 = vrot.lane.b32.xlu0 %v745, 64
  %v749 = vpop.permute.xlu0 %748
  %v751 = vmul.f32 %v744, %v749
  %753 = vrot.lane.b32.xlu0 %v751, 32
  %v754 = vpop.permute.xlu0 %753
  %v756 = vadd.f32 %v746, %v754
  %v757 = vtanh.pop %v756
  %759 = vrot.lane.b32.xlu0 %v757, 64
  %v760 = vpop.permute.xlu0 %759
  %v762 = vmul.f32 %v744, %v760
  %s763 = scalar_lea.vmem [#allocation4], 56
  %v764 = vld [vmem:[%s763] sm:$0xff]
  %v765 = vpack.c.bf16 %v762, %v762
  %767 = vrot.lane.b32.xlu0 %v765, 32
  %v768 = vpop.permute.xlu0 %767
  %v770 = vsel %vm260, %v768, 0
  %772 = vmatprep.subr.bf16.mxu0 0
  %773 = vmatpush1.bf16.msra.mxu0 %v256
  %774 = vmatprep.subr.bf16.mxu0 0
  %775 = vmatpush1.bf16.msra.mxu0 %v257
  %776 = vmatprep.subr.bf16.mxu0 0
  %777 = vmatpush1.bf16.msra.mxu0 0
  %778 = vmatprep.subr.bf16.mxu0 0
  %779 = vmatpush1.bf16.msra.mxu0 0
  %780 = vmatprep.subr.bf16.mxu0 0
  %781 = vmatpush1.bf16.msra.mxu0 0
  %782 = vmatprep.subr.bf16.mxu0 0
  %783 = vmatpush1.bf16.msra.mxu0 0
  %784 = vmatprep.subr.bf16.mxu0 0
  %785 = vmatpush1.bf16.msra.mxu0 0
  %786 = vmatprep.subr.bf16.mxu0 0
  %787 = vmatpush1.bf16.msra.mxu0 0
  %788 = vmatprep.subr.bf16.mxu0 0
  %789 = vmatpush1.bf16.msra.mxu0 0
  %790 = vmatprep.subr.bf16.mxu0 0
  %791 = vmatpush1.bf16.msra.mxu0 0
  %792 = vmatprep.subr.bf16.mxu0 0
  %793 = vmatpush1.bf16.msra.mxu0 0
  %794 = vmatprep.subr.bf16.mxu0 0
  %795 = vmatpush1.bf16.msra.mxu0 0
  %796 = vmatprep.subr.bf16.mxu0 0
  %797 = vmatpush1.bf16.msra.mxu0 0
  %798 = vmatprep.subr.bf16.mxu0 0
  %799 = vmatpush1.bf16.msra.mxu0 0
  %800 = vmatprep.subr.bf16.mxu0 0
  %801 = vmatpush1.bf16.msra.mxu0 0
  %802 = vmatprep.subr.bf16.mxu0 0
  %803 = vmatpush1.bf16.msra.mxu0 0
  %804 = vmatprep.mubr.bf16.mxu0 0
  %805 = vmatmul.mubr.bf16.gmra.mrb[0].mxu0 %v770
  %v806 = vpop.f32.mrb[0].mxu0
  %v807 = vadd.f32 0.0, %v806
  %v808 = vpop.f32.mrb[0].mxu0
  %v809 = vpop.f32.mrb[0].mxu0
  %v810 = vpop.f32.mrb[0].mxu0
  %811 = vdwg.mxu0
  %v812 = vadd.f32 %v764, %v807
  %v813 = vmul.f32 %v812, 0.5
  %v814 = vtanh.pop %v813
  %v815 = vmul.f32 %v814, 0.5
  %v816 = vadd.f32 %v815, 0.5
  %v817 = vtanh.pop %v812
  %v818 = vmul.f32 %v816, %v756
  %820 = vrot.lane.b32.xlu0 %v817, 64
  %v821 = vpop.permute.xlu0 %820
  %v823 = vmul.f32 %v816, %v821
  %825 = vrot.lane.b32.xlu0 %v823, 32
  %v826 = vpop.permute.xlu0 %825
  %v828 = vadd.f32 %v818, %v826
  %v829 = vtanh.pop %v828
  %831 = vrot.lane.b32.xlu0 %v829, 64
  %v832 = vpop.permute.xlu0 %831
  %v834 = vmul.f32 %v816, %v832
  %s835 = scalar_lea.vmem [#allocation4], 64
  %v836 = vld [vmem:[%s835] sm:$0xff]
  %v837 = vpack.c.bf16 %v834, %v834
  %839 = vrot.lane.b32.xlu0 %v837, 32
  %v840 = vpop.permute.xlu0 %839
  %v842 = vsel %vm260, %v840, 0
  %844 = vmatprep.subr.bf16.mxu0 0
  %845 = vmatpush1.bf16.msra.mxu0 %v256
  %846 = vmatprep.subr.bf16.mxu0 0
  %847 = vmatpush1.bf16.msra.mxu0 %v257
  %848 = vmatprep.subr.bf16.mxu0 0
  %849 = vmatpush1.bf16.msra.mxu0 0
  %850 = vmatprep.subr.bf16.mxu0 0
  %851 = vmatpush1.bf16.msra.mxu0 0
  %852 = vmatprep.subr.bf16.mxu0 0
  %853 = vmatpush1.bf16.msra.mxu0 0
  %854 = vmatprep.subr.bf16.mxu0 0
  %855 = vmatpush1.bf16.msra.mxu0 0
  %856 = vmatprep.subr.bf16.mxu0 0
  %857 = vmatpush1.bf16.msra.mxu0 0
  %858 = vmatprep.subr.bf16.mxu0 0
  %859 = vmatpush1.bf16.msra.mxu0 0
  %860 = vmatprep.subr.bf16.mxu0 0
  %861 = vmatpush1.bf16.msra.mxu0 0
  %862 = vmatprep.subr.bf16.mxu0 0
  %863 = vmatpush1.bf16.msra.mxu0 0
  %864 = vmatprep.subr.bf16.mxu0 0
  %865 = vmatpush1.bf16.msra.mxu0 0
  %866 = vmatprep.subr.bf16.mxu0 0
  %867 = vmatpush1.bf16.msra.mxu0 0
  %868 = vmatprep.subr.bf16.mxu0 0
  %869 = vmatpush1.bf16.msra.mxu0 0
  %870 = vmatprep.subr.bf16.mxu0 0
  %871 = vmatpush1.bf16.msra.mxu0 0
  %872 = vmatprep.subr.bf16.mxu0 0
  %873 = vmatpush1.bf16.msra.mxu0 0
  %874 = vmatprep.subr.bf16.mxu0 0
  %875 = vmatpush1.bf16.msra.mxu0 0
  %876 = vmatprep.mubr.bf16.mxu0 0
  %877 = vmatmul.mubr.bf16.gmra.mrb[0].mxu0 %v842
  %v878 = vpop.f32.mrb[0].mxu0
  %v879 = vadd.f32 0.0, %v878
  %v880 = vpop.f32.mrb[0].mxu0
  %v881 = vpop.f32.mrb[0].mxu0
  %v882 = vpop.f32.mrb[0].mxu0
  %883 = vdwg.mxu0
  %v884 = vadd.f32 %v836, %v879
  %v885 = vmul.f32 %v884, 0.5
  %v886 = vtanh.pop %v885
  %v887 = vmul.f32 %v886, 0.5
  %v888 = vadd.f32 %v887, 0.5
  %v889 = vtanh.pop %v884
  %v890 = vmul.f32 %v888, %v828
  %892 = vrot.lane.b32.xlu0 %v889, 64
  %v893 = vpop.permute.xlu0 %892
  %v895 = vmul.f32 %v888, %v893
  %897 = vrot.lane.b32.xlu0 %v895, 32
  %v898 = vpop.permute.xlu0 %897
  %v900 = vadd.f32 %v890, %v898
  %v901 = vtanh.pop %v900
  %903 = vrot.lane.b32.xlu0 %v901, 64
  %v904 = vpop.permute.xlu0 %903
  %v906 = vmul.f32 %v888, %v904
  %s907 = scalar_lea.vmem [#allocation4], 72
  %v908 = vld [vmem:[%s907] sm:$0xff]
  %v909 = vpack.c.bf16 %v906, %v906
  %911 = vrot.lane.b32.xlu0 %v909, 32
  %v912 = vpop.permute.xlu0 %911
  %v914 = vsel %vm260, %v912, 0
  %916 = vmatprep.subr.bf16.mxu0 0
  %917 = vmatpush1.bf16.msra.mxu0 %v256
  %918 = vmatprep.subr.bf16.mxu0 0
  %919 = vmatpush1.bf16.msra.mxu0 %v257
  %920 = vmatprep.subr.bf16.mxu0 0
  %921 = vmatpush1.bf16.msra.mxu0 0
  %922 = vmatprep.subr.bf16.mxu0 0
  %923 = vmatpush1.bf16.msra.mxu0 0
  %924 = vmatprep.subr.bf16.mxu0 0
  %925 = vmatpush1.bf16.msra.mxu0 0
  %926 = vmatprep.subr.bf16.mxu0 0
  %927 = vmatpush1.bf16.msra.mxu0 0
  %928 = vmatprep.subr.bf16.mxu0 0
  %929 = vmatpush1.bf16.msra.mxu0 0
  %930 = vmatprep.subr.bf16.mxu0 0
  %931 = vmatpush1.bf16.msra.mxu0 0
  %932 = vmatprep.subr.bf16.mxu0 0
  %933 = vmatpush1.bf16.msra.mxu0 0
  %934 = vmatprep.subr.bf16.mxu0 0
  %935 = vmatpush1.bf16.msra.mxu0 0
  %936 = vmatprep.subr.bf16.mxu0 0
  %937 = vmatpush1.bf16.msra.mxu0 0
  %938 = vmatprep.subr.bf16.mxu0 0
  %939 = vmatpush1.bf16.msra.mxu0 0
  %940 = vmatprep.subr.bf16.mxu0 0
  %941 = vmatpush1.bf16.msra.mxu0 0
  %942 = vmatprep.subr.bf16.mxu0 0
  %943 = vmatpush1.bf16.msra.mxu0 0
  %944 = vmatprep.subr.bf16.mxu0 0
  %945 = vmatpush1.bf16.msra.mxu0 0
  %946 = vmatprep.subr.bf16.mxu0 0
  %947 = vmatpush1.bf16.msra.mxu0 0
  %948 = vmatprep.mubr.bf16.mxu0 0
  %949 = vmatmul.mubr.bf16.gmra.mrb[0].mxu0 %v914
  %v950 = vpop.f32.mrb[0].mxu0
  %v951 = vadd.f32 0.0, %v950
  %v952 = vpop.f32.mrb[0].mxu0
  %v953 = vpop.f32.mrb[0].mxu0
  %v954 = vpop.f32.mrb[0].mxu0
  %955 = vdwg.mxu0
  %v956 = vadd.f32 %v908, %v951
  %v957 = vmul.f32 %v956, 0.5
  %v958 = vtanh.pop %v957
  %v959 = vmul.f32 %v958, 0.5
  %v960 = vadd.f32 %v959, 0.5
  %v961 = vtanh.pop %v956
  %v962 = vmul.f32 %v960, %v900
  %964 = vrot.lane.b32.xlu0 %v961, 64
  %v965 = vpop.permute.xlu0 %964
  %v967 = vmul.f32 %v960, %v965
  %969 = vrot.lane.b32.xlu0 %v967, 32
  %v970 = vpop.permute.xlu0 %969
  %v972 = vadd.f32 %v962, %v970
  %v973 = vtanh.pop %v972
  %975 = vrot.lane.b32.xlu0 %v973, 64
  %v976 = vpop.permute.xlu0 %975
  %v978 = vmul.f32 %v960, %v976
  %s979 = scalar_lea.vmem [#allocation4], 80
  %v980 = vld [vmem:[%s979] sm:$0xff]
  %v981 = vpack.c.bf16 %v978, %v978
  %983 = vrot.lane.b32.xlu0 %v981, 32
  %v984 = vpop.permute.xlu0 %983
  %v986 = vsel %vm260, %v984, 0
  %988 = vmatprep.subr.bf16.mxu0 0
  %989 = vmatpush1.bf16.msra.mxu0 %v256
  %990 = vmatprep.subr.bf16.mxu0 0
  %991 = vmatpush1.bf16.msra.mxu0 %v257
  %992 = vmatprep.subr.bf16.mxu0 0
  %993 = vmatpush1.bf16.msra.mxu0 0
  %994 = vmatprep.subr.bf16.mxu0 0
  %995 = vmatpush1.bf16.msra.mxu0 0
  %996 = vmatprep.subr.bf16.mxu0 0
  %997 = vmatpush1.bf16.msra.mxu0 0
  %998 = vmatprep.subr.bf16.mxu0 0
  %999 = vmatpush1.bf16.msra.mxu0 0
  %1000 = vmatprep.subr.bf16.mxu0 0
  %1001 = vmatpush1.bf16.msra.mxu0 0
  %1002 = vmatprep.subr.bf16.mxu0 0
  %1003 = vmatpush1.bf16.msra.mxu0 0
  %1004 = vmatprep.subr.bf16.mxu0 0
  %1005 = vmatpush1.bf16.msra.mxu0 0
  %1006 = vmatprep.subr.bf16.mxu0 0
  %1007 = vmatpush1.bf16.msra.mxu0 0
  %1008 = vmatprep.subr.bf16.mxu0 0
  %1009 = vmatpush1.bf16.msra.mxu0 0
  %1010 = vmatprep.subr.bf16.mxu0 0
  %1011 = vmatpush1.bf16.msra.mxu0 0
  %1012 = vmatprep.subr.bf16.mxu0 0
  %1013 = vmatpush1.bf16.msra.mxu0 0
  %1014 = vmatprep.subr.bf16.mxu0 0
  %1015 = vmatpush1.bf16.msra.mxu0 0
  %1016 = vmatprep.subr.bf16.mxu0 0
  %1017 = vmatpush1.bf16.msra.mxu0 0
  %1018 = vmatprep.subr.bf16.mxu0 0
  %1019 = vmatpush1.bf16.msra.mxu0 0
  %1020 = vmatprep.mubr.bf16.mxu0 0
  %1021 = vmatmul.mubr.bf16.gmra.mrb[0].mxu0 %v986
  %v1022 = vpop.f32.mrb[0].mxu0
  %v1023 = vadd.f32 0.0, %v1022
  %v1024 = vpop.f32.mrb[0].mxu0
  %v1025 = vpop.f32.mrb[0].mxu0
  %v1026 = vpop.f32.mrb[0].mxu0
  %1027 = vdwg.mxu0
  %v1028 = vadd.f32 %v980, %v1023
  %v1029 = vmul.f32 %v1028, 0.5
  %v1030 = vtanh.pop %v1029
  %v1031 = vmul.f32 %v1030, 0.5
  %v1032 = vadd.f32 %v1031, 0.5
  %v1033 = vtanh.pop %v1028
  %v1034 = vmul.f32 %v1032, %v972
  %1036 = vrot.lane.b32.xlu0 %v1033, 64
  %v1037 = vpop.permute.xlu0 %1036
  %v1039 = vmul.f32 %v1032, %v1037
  %1041 = vrot.lane.b32.xlu0 %v1039, 32
  %v1042 = vpop.permute.xlu0 %1041
  %v1044 = vadd.f32 %v1034, %v1042
  %v1045 = vtanh.pop %v1044
  %1047 = vrot.lane.b32.xlu0 %v1045, 64
  %v1048 = vpop.permute.xlu0 %1047
  %v1050 = vmul.f32 %v1032, %v1048
  %s1051 = scalar_lea.vmem [#allocation4], 88
  %v1052 = vld [vmem:[%s1051] sm:$0xff]
  %v1053 = vpack.c.bf16 %v1050, %v1050
  %1055 = vrot.lane.b32.xlu0 %v1053, 32
  %v1056 = vpop.permute.xlu0 %1055
  %v1058 = vsel %vm260, %v1056, 0
  %1060 = vmatprep.subr.bf16.mxu0 0
  %1061 = vmatpush1.bf16.msra.mxu0 %v256
  %1062 = vmatprep.subr.bf16.mxu0 0
  %1063 = vmatpush1.bf16.msra.mxu0 %v257
  %1064 = vmatprep.subr.bf16.mxu0 0
  %1065 = vmatpush1.bf16.msra.mxu0 0
  %1066 = vmatprep.subr.bf16.mxu0 0
  %1067 = vmatpush1.bf16.msra.mxu0 0
  %1068 = vmatprep.subr.bf16.mxu0 0
  %1069 = vmatpush1.bf16.msra.mxu0 0
  %1070 = vmatprep.subr.bf16.mxu0 0
  %1071 = vmatpush1.bf16.msra.mxu0 0
  %1072 = vmatprep.subr.bf16.mxu0 0
  %1073 = vmatpush1.bf16.msra.mxu0 0
  %1074 = vmatprep.subr.bf16.mxu0 0
  %1075 = vmatpush1.bf16.msra.mxu0 0
  %1076 = vmatprep.subr.bf16.mxu0 0
  %1077 = vmatpush1.bf16.msra.mxu0 0
  %1078 = vmatprep.subr.bf16.mxu0 0
  %1079 = vmatpush1.bf16.msra.mxu0 0
  %1080 = vmatprep.subr.bf16.mxu0 0
  %1081 = vmatpush1.bf16.msra.mxu0 0
  %1082 = vmatprep.subr.bf16.mxu0 0
  %1083 = vmatpush1.bf16.msra.mxu0 0
  %1084 = vmatprep.subr.bf16.mxu0 0
  %1085 = vmatpush1.bf16.msra.mxu0 0
  %1086 = vmatprep.subr.bf16.mxu0 0
  %1087 = vmatpush1.bf16.msra.mxu0 0
  %1088 = vmatprep.subr.bf16.mxu0 0
  %1089 = vmatpush1.bf16.msra.mxu0 0
  %1090 = vmatprep.subr.bf16.mxu0 0
  %1091 = vmatpush1.bf16.msra.mxu0 0
  %1092 = vmatprep.mubr.bf16.mxu0 0
  %1093 = vmatmul.mubr.bf16.gmra.mrb[0].mxu0 %v1058
  %v1094 = vpop.f32.mrb[0].mxu0
  %v1095 = vadd.f32 0.0, %v1094
  %v1096 = vpop.f32.mrb[0].mxu0
  %v1097 = vpop.f32.mrb[0].mxu0
  %v1098 = vpop.f32.mrb[0].mxu0
  %1099 = vdwg.mxu0
  %v1100 = vadd.f32 %v1052, %v1095
  %v1101 = vmul.f32 %v1100, 0.5
  %v1102 = vtanh.pop %v1101
  %v1103 = vmul.f32 %v1102, 0.5
  %v1104 = vadd.f32 %v1103, 0.5
  %v1105 = vtanh.pop %v1100
  %v1106 = vmul.f32 %v1104, %v1044
  %1108 = vrot.lane.b32.xlu0 %v1105, 64
  %v1109 = vpop.permute.xlu0 %1108
  %v1111 = vmul.f32 %v1104, %v1109
  %1113 = vrot.lane.b32.xlu0 %v1111, 32
  %v1114 = vpop.permute.xlu0 %1113
  %v1116 = vadd.f32 %v1106, %v1114
  %v1117 = vtanh.pop %v1116
  %1119 = vrot.lane.b32.xlu0 %v1117, 64
  %v1120 = vpop.permute.xlu0 %1119
  %v1122 = vmul.f32 %v1104, %v1120
  %s1123 = scalar_lea.vmem [#allocation4], 96
  %v1124 = vld [vmem:[%s1123] sm:$0xff]
  %v1125 = vpack.c.bf16 %v1122, %v1122
  %1127 = vrot.lane.b32.xlu0 %v1125, 32
  %v1128 = vpop.permute.xlu0 %1127
  %v1130 = vsel %vm260, %v1128, 0
  %1132 = vmatprep.subr.bf16.mxu0 0
  %1133 = vmatpush1.bf16.msra.mxu0 %v256
  %1134 = vmatprep.subr.bf16.mxu0 0
  %1135 = vmatpush1.bf16.msra.mxu0 %v257
  %1136 = vmatprep.subr.bf16.mxu0 0
  %1137 = vmatpush1.bf16.msra.mxu0 0
  %1138 = vmatprep.subr.bf16.mxu0 0
  %1139 = vmatpush1.bf16.msra.mxu0 0
  %1140 = vmatprep.subr.bf16.mxu0 0
  %1141 = vmatpush1.bf16.msra.mxu0 0
  %1142 = vmatprep.subr.bf16.mxu0 0
  %1143 = vmatpush1.bf16.msra.mxu0 0
  %1144 = vmatprep.subr.bf16.mxu0 0
  %1145 = vmatpush1.bf16.msra.mxu0 0
  %1146 = vmatprep.subr.bf16.mxu0 0
  %1147 = vmatpush1.bf16.msra.mxu0 0
  %1148 = vmatprep.subr.bf16.mxu0 0
  %1149 = vmatpush1.bf16.msra.mxu0 0
  %1150 = vmatprep.subr.bf16.mxu0 0
  %1151 = vmatpush1.bf16.msra.mxu0 0
  %1152 = vmatprep.subr.bf16.mxu0 0
  %1153 = vmatpush1.bf16.msra.mxu0 0
  %1154 = vmatprep.subr.bf16.mxu0 0
  %1155 = vmatpush1.bf16.msra.mxu0 0
  %1156 = vmatprep.subr.bf16.mxu0 0
  %1157 = vmatpush1.bf16.msra.mxu0 0
  %1158 = vmatprep.subr.bf16.mxu0 0
  %1159 = vmatpush1.bf16.msra.mxu0 0
  %1160 = vmatprep.subr.bf16.mxu0 0
  %1161 = vmatpush1.bf16.msra.mxu0 0
  %1162 = vmatprep.subr.bf16.mxu0 0
  %1163 = vmatpush1.bf16.msra.mxu0 0
  %1164 = vmatprep.mubr.bf16.mxu0 0
  %1165 = vmatmul.mubr.bf16.gmra.mrb[0].mxu0 %v1130
  %v1166 = vpop.f32.mrb[0].mxu0
  %v1167 = vadd.f32 0.0, %v1166
  %v1168 = vpop.f32.mrb[0].mxu0
  %v1169 = vpop.f32.mrb[0].mxu0
  %v1170 = vpop.f32.mrb[0].mxu0
  %1171 = vdwg.mxu0
  %v1172 = vadd.f32 %v1124, %v1167
  %v1173 = vmul.f32 %v1172, 0.5
  %v1174 = vtanh.pop %v1173
  %v1175 = vmul.f32 %v1174, 0.5
  %v1176 = vadd.f32 %v1175, 0.5
  %v1177 = vtanh.pop %v1172
  %v1178 = vmul.f32 %v1176, %v1116
  %1180 = vrot.lane.b32.xlu0 %v1177, 64
  %v1181 = vpop.permute.xlu0 %1180
  %v1183 = vmul.f32 %v1176, %v1181
  %1185 = vrot.lane.b32.xlu0 %v1183, 32
  %v1186 = vpop.permute.xlu0 %1185
  %v1188 = vadd.f32 %v1178, %v1186
  %v1189 = vtanh.pop %v1188
  %1191 = vrot.lane.b32.xlu0 %v1189, 64
  %v1192 = vpop.permute.xlu0 %1191
  %v1194 = vmul.f32 %v1176, %v1192
  %s1195 = scalar_lea.vmem [#allocation4], 104
  %v1196 = vld [vmem:[%s1195] sm:$0xff]
  %v1197 = vpack.c.bf16 %v1194, %v1194
  %1199 = vrot.lane.b32.xlu0 %v1197, 32
  %v1200 = vpop.permute.xlu0 %1199
  %v1202 = vsel %vm260, %v1200, 0
  %1204 = vmatprep.subr.bf16.mxu0 0
  %1205 = vmatpush1.bf16.msra.mxu0 %v256
  %1206 = vmatprep.subr.bf16.mxu0 0
  %1207 = vmatpush1.bf16.msra.mxu0 %v257
  %1208 = vmatprep.subr.bf16.mxu0 0
  %1209 = vmatpush1.bf16.msra.mxu0 0
  %1210 = vmatprep.subr.bf16.mxu0 0
  %1211 = vmatpush1.bf16.msra.mxu0 0
  %1212 = vmatprep.subr.bf16.mxu0 0
  %1213 = vmatpush1.bf16.msra.mxu0 0
  %1214 = vmatprep.subr.bf16.mxu0 0
  %1215 = vmatpush1.bf16.msra.mxu0 0
  %1216 = vmatprep.subr.bf16.mxu0 0
  %1217 = vmatpush1.bf16.msra.mxu0 0
  %1218 = vmatprep.subr.bf16.mxu0 0
  %1219 = vmatpush1.bf16.msra.mxu0 0
  %1220 = vmatprep.subr.bf16.mxu0 0
  %1221 = vmatpush1.bf16.msra.mxu0 0
  %1222 = vmatprep.subr.bf16.mxu0 0
  %1223 = vmatpush1.bf16.msra.mxu0 0
  %1224 = vmatprep.subr.bf16.mxu0 0
  %1225 = vmatpush1.bf16.msra.mxu0 0
  %1226 = vmatprep.subr.bf16.mxu0 0
  %1227 = vmatpush1.bf16.msra.mxu0 0
  %1228 = vmatprep.subr.bf16.mxu0 0
  %1229 = vmatpush1.bf16.msra.mxu0 0
  %1230 = vmatprep.subr.bf16.mxu0 0
  %1231 = vmatpush1.bf16.msra.mxu0 0
  %1232 = vmatprep.subr.bf16.mxu0 0
  %1233 = vmatpush1.bf16.msra.mxu0 0
  %1234 = vmatprep.subr.bf16.mxu0 0
  %1235 = vmatpush1.bf16.msra.mxu0 0
  %1236 = vmatprep.mubr.bf16.mxu0 0
  %1237 = vmatmul.mubr.bf16.gmra.mrb[0].mxu0 %v1202
  %v1238 = vpop.f32.mrb[0].mxu0
  %v1239 = vadd.f32 0.0, %v1238
  %v1240 = vpop.f32.mrb[0].mxu0
  %v1241 = vpop.f32.mrb[0].mxu0
  %v1242 = vpop.f32.mrb[0].mxu0
  %1243 = vdwg.mxu0
  %v1244 = vadd.f32 %v1196, %v1239
  %v1245 = vmul.f32 %v1244, 0.5
  %v1246 = vtanh.pop %v1245
  %v1247 = vmul.f32 %v1246, 0.5
  %v1248 = vadd.f32 %v1247, 0.5
  %v1249 = vtanh.pop %v1244
  %v1250 = vmul.f32 %v1248, %v1188
  %1252 = vrot.lane.b32.xlu0 %v1249, 64
  %v1253 = vpop.permute.xlu0 %1252
  %v1255 = vmul.f32 %v1248, %v1253
  %1257 = vrot.lane.b32.xlu0 %v1255, 32
  %v1258 = vpop.permute.xlu0 %1257
  %v1260 = vadd.f32 %v1250, %v1258
  %v1261 = vtanh.pop %v1260
  %1263 = vrot.lane.b32.xlu0 %v1261, 64
  %v1264 = vpop.permute.xlu0 %1263
  %v1266 = vmul.f32 %v1248, %v1264
  %s1267 = scalar_lea.vmem [#allocation4], 112
  %v1268 = vld [vmem:[%s1267] sm:$0xff]
  %v1269 = vpack.c.bf16 %v1266, %v1266
  %1271 = vrot.lane.b32.xlu0 %v1269, 32
  %v1272 = vpop.permute.xlu0 %1271
  %v1274 = vsel %vm260, %v1272, 0
  %1276 = vmatprep.subr.bf16.mxu0 0
  %1277 = vmatpush1.bf16.msra.mxu0 %v256
  %1278 = vmatprep.subr.bf16.mxu0 0
  %1279 = vmatpush1.bf16.msra.mxu0 %v257
  %1280 = vmatprep.subr.bf16.mxu0 0
  %1281 = vmatpush1.bf16.msra.mxu0 0
  %1282 = vmatprep.subr.bf16.mxu0 0
  %1283 = vmatpush1.bf16.msra.mxu0 0
  %1284 = vmatprep.subr.bf16.mxu0 0
  %1285 = vmatpush1.bf16.msra.mxu0 0
  %1286 = vmatprep.subr.bf16.mxu0 0
  %1287 = vmatpush1.bf16.msra.mxu0 0
  %1288 = vmatprep.subr.bf16.mxu0 0
  %1289 = vmatpush1.bf16.msra.mxu0 0
  %1290 = vmatprep.subr.bf16.mxu0 0
  %1291 = vmatpush1.bf16.msra.mxu0 0
  %1292 = vmatprep.subr.bf16.mxu0 0
  %1293 = vmatpush1.bf16.msra.mxu0 0
  %1294 = vmatprep.subr.bf16.mxu0 0
  %1295 = vmatpush1.bf16.msra.mxu0 0
  %1296 = vmatprep.subr.bf16.mxu0 0
  %1297 = vmatpush1.bf16.msra.mxu0 0
  %1298 = vmatprep.subr.bf16.mxu0 0
  %1299 = vmatpush1.bf16.msra.mxu0 0
  %1300 = vmatprep.subr.bf16.mxu0 0
  %1301 = vmatpush1.bf16.msra.mxu0 0
  %1302 = vmatprep.subr.bf16.mxu0 0
  %1303 = vmatpush1.bf16.msra.mxu0 0
  %1304 = vmatprep.subr.bf16.mxu0 0
  %1305 = vmatpush1.bf16.msra.mxu0 0
  %1306 = vmatprep.subr.bf16.mxu0 0
  %1307 = vmatpush1.bf16.msra.mxu0 0
  %1308 = vmatprep.mubr.bf16.mxu0 0
  %1309 = vmatmul.mubr.bf16.gmra.mrb[0].mxu0 %v1274
  %v1310 = vpop.f32.mrb[0].mxu0
  %v1311 = vadd.f32 0.0, %v1310
  %v1312 = vpop.f32.mrb[0].mxu0
  %v1313 = vpop.f32.mrb[0].mxu0
  %v1314 = vpop.f32.mrb[0].mxu0
  %1315 = vdwg.mxu0
  %v1316 = vadd.f32 %v1268, %v1311
  %v1317 = vmul.f32 %v1316, 0.5
  %v1318 = vtanh.pop %v1317
  %v1319 = vmul.f32 %v1318, 0.5
  %v1320 = vadd.f32 %v1319, 0.5
  %v1321 = vtanh.pop %v1316
  %v1322 = vmul.f32 %v1320, %v1260
  %1324 = vrot.lane.b32.xlu0 %v1321, 64
  %v1325 = vpop.permute.xlu0 %1324
  %v1327 = vmul.f32 %v1320, %v1325
  %1329 = vrot.lane.b32.xlu0 %v1327, 32
  %v1330 = vpop.permute.xlu0 %1329
  %v1332 = vadd.f32 %v1322, %v1330
  %v1333 = vtanh.pop %v1332
  %1335 = vrot.lane.b32.xlu0 %v1333, 64
  %v1336 = vpop.permute.xlu0 %1335
  %v1338 = vmul.f32 %v1320, %v1336
  %s1339 = scalar_lea.vmem [#allocation4], 120
  %v1340 = vld [vmem:[%s1339] sm:$0xff]
  %v1341 = vpack.c.bf16 %v1338, %v1338
  %1343 = vrot.lane.b32.xlu0 %v1341, 32
  %v1344 = vpop.permute.xlu0 %1343
  %v1346 = vsel %vm260, %v1344, 0
  %1348 = vmatprep.subr.bf16.mxu0 0
  %1349 = vmatpush1.bf16.msra.mxu0 %v256
  %1350 = vmatprep.subr.bf16.mxu0 0
  %1351 = vmatpush1.bf16.msra.mxu0 %v257
  %1352 = vmatprep.subr.bf16.mxu0 0
  %1353 = vmatpush1.bf16.msra.mxu0 0
  %1354 = vmatprep.subr.bf16.mxu0 0
  %1355 = vmatpush1.bf16.msra.mxu0 0
  %1356 = vmatprep.subr.bf16.mxu0 0
  %1357 = vmatpush1.bf16.msra.mxu0 0
  %1358 = vmatprep.subr.bf16.mxu0 0
  %1359 = vmatpush1.bf16.msra.mxu0 0
  %1360 = vmatprep.subr.bf16.mxu0 0
  %1361 = vmatpush1.bf16.msra.mxu0 0
  %1362 = vmatprep.subr.bf16.mxu0 0
  %1363 = vmatpush1.bf16.msra.mxu0 0
  %1364 = vmatprep.subr.bf16.mxu0 0
  %1365 = vmatpush1.bf16.msra.mxu0 0
  %1366 = vmatprep.subr.bf16.mxu0 0
  %1367 = vmatpush1.bf16.msra.mxu0 0
  %1368 = vmatprep.subr.bf16.mxu0 0
  %1369 = vmatpush1.bf16.msra.mxu0 0
  %1370 = vmatprep.subr.bf16.mxu0 0
  %1371 = vmatpush1.bf16.msra.mxu0 0
  %1372 = vmatprep.subr.bf16.mxu0 0
  %1373 = vmatpush1.bf16.msra.mxu0 0
  %1374 = vmatprep.subr.bf16.mxu0 0
  %1375 = vmatpush1.bf16.msra.mxu0 0
  %1376 = vmatprep.subr.bf16.mxu0 0
  %1377 = vmatpush1.bf16.msra.mxu0 0
  %1378 = vmatprep.subr.bf16.mxu0 0
  %1379 = vmatpush1.bf16.msra.mxu0 0
  %1380 = vmatprep.mubr.bf16.mxu0 0
  %1381 = vmatmul.mubr.bf16.gmra.mrb[0].mxu0 %v1346
  %v1382 = vpop.f32.mrb[0].mxu0
  %v1383 = vadd.f32 0.0, %v1382
  %v1384 = vpop.f32.mrb[0].mxu0
  %v1385 = vpop.f32.mrb[0].mxu0
  %v1386 = vpop.f32.mrb[0].mxu0
  %1387 = vdwg.mxu0
  %v1388 = vadd.f32 %v1340, %v1383
  %v1389 = vmul.f32 %v1388, 0.5
  %v1390 = vtanh.pop %v1389
  %v1391 = vmul.f32 %v1390, 0.5
  %v1392 = vadd.f32 %v1391, 0.5
  %v1393 = vtanh.pop %v1388
  %v1394 = vmul.f32 %v1392, %v1332
  %1396 = vrot.lane.b32.xlu0 %v1393, 64
  %v1397 = vpop.permute.xlu0 %1396
  %v1399 = vmul.f32 %v1392, %v1397
  %1401 = vrot.lane.b32.xlu0 %v1399, 32
  %v1402 = vpop.permute.xlu0 %1401
  %v1404 = vadd.f32 %v1394, %v1402
  %v1405 = vtanh.pop %v1404
  %1407 = vrot.lane.b32.xlu0 %v1405, 64
  %v1408 = vpop.permute.xlu0 %1407
  %v1410 = vmul.f32 %v1392, %v1408
  %1412 = vrot.lane.b32.xlu0 %v1410, 32
  %v1413 = vpop.permute.xlu0 %1412
  %1415 = vst.msk [vmem:[#allocation2] sm:$0xff] %vm260, %v1413
  %1417 = vrot.lane.b32.xlu0 %v1404, 96
  %v1418 = vpop.permute.xlu0 %1417
  %1420 = vst.msk [vmem:[#allocation3] sm:$0xff] %vm260, %v1418
  // Predicated region
  $region30: #{lstm_seq_forward.1} parent=0 // pred_check
    %p1421 = pneg %p24
  $region31: #{lstm_seq_forward.1} parent=0 // pred_check_branch
    %1423 = sbr.rel (%p1421) target = $region33
  $region32: #{lstm_seq_forward.1} parent=0 // pred_region
    %v1424 = vpack.c.bf16 %v1410, %v1410
    %v1425 = vld [vmem:[%s4] sm:$0xf]
    %v1426 = vld [vmem:[%s4 + $0x4] sm:$0xf]
    %v1427 = vld [vmem:[%s4 + $0x8] sm:$0xf]
    %v1428 = vld [vmem:[%s4 + $0xc] sm:$0xf]
    %v1429 = vld [vmem:[%s5] sm:$0x1]
    %v1431 = vlaneseq
    %v1432 = vshrl.u32 %v1431, 7
    %v1433 = vsub.s32 0, %v1432
    %v1434 = vrot.slane %v1429, %v1433
    %1437 = vrot.lane.b32.xlu0 %v1424, 32
    %v1438 = vpop.permute.xlu0 %1437
    %v1443 = vunpack.c.l.b16 %v1425
    %v1444 = vunpack.c.l.b16 %v1426
    %v1445 = vunpack.c.l.b16 %v1427
    %v1446 = vunpack.c.l.b16 %v1428
    %v1447 = vpack.c.b16 %v1444, %v1443
    %v1448 = vpack.c.b16 %v1446, %v1445
    %v1452 = vsel %vm260, %v1438, 0
    %1454 = vmatprep.subr.bf16.mxu0 0
    %1455 = vmatpush1.bf16.msra.mxu0 %v1447
    %1456 = vmatprep.subr.bf16.mxu0 0
    %1457 = vmatpush1.bf16.msra.mxu0 %v1448
    %1458 = vmatprep.subr.bf16.mxu0 0
    %1459 = vmatpush1.bf16.msra.mxu0 0
    %1460 = vmatprep.subr.bf16.mxu0 0
    %1461 = vmatpush1.bf16.msra.mxu0 0
    %1462 = vmatprep.subr.bf16.mxu0 0
    %1463 = vmatpush1.bf16.msra.mxu0 0
    %1464 = vmatprep.subr.bf16.mxu0 0
    %1465 = vmatpush1.bf16.msra.mxu0 0
    %1466 = vmatprep.subr.bf16.mxu0 0
    %1467 = vmatpush1.bf16.msra.mxu0 0
    %1468 = vmatprep.subr.bf16.mxu0 0
    %1469 = vmatpush1.bf16.msra.mxu0 0
    %1470 = vmatprep.subr.bf16.mxu0 0
    %1471 = vmatpush1.bf16.msra.mxu0 0
    %1472 = vmatprep.subr.bf16.mxu0 0
    %1473 = vmatpush1.bf16.msra.mxu0 0
    %1474 = vmatprep.subr.bf16.mxu0 0
    %1475 = vmatpush1.bf16.msra.mxu0 0
    %1476 = vmatprep.subr.bf16.mxu0 0
    %1477 = vmatpush1.bf16.msra.mxu0 0
    %1478 = vmatprep.subr.bf16.mxu0 0
    %1479 = vmatpush1.bf16.msra.mxu0 0
    %1480 = vmatprep.subr.bf16.mxu0 0
    %1481 = vmatpush1.bf16.msra.mxu0 0
    %1482 = vmatprep.subr.bf16.mxu0 0
    %1483 = vmatpush1.bf16.msra.mxu0 0
    %1484 = vmatprep.subr.bf16.mxu0 0
    %1485 = vmatpush1.bf16.msra.mxu0 0
    %1486 = vmatprep.mubr.bf16.mxu0 0
    %1487 = vmatmul.mubr.bf16.gmra.mrb[0].mxu0 %v1452
    %v1488 = vpop.f32.mrb[0].mxu0
    %v1489 = vadd.f32 %v1434, %v1488
    %v1490 = vpop.f32.mrb[0].mxu0
    %v1491 = vpop.f32.mrb[0].mxu0
    %v1492 = vpop.f32.mrb[0].mxu0
    %1493 = vdwg.mxu0
    %vm1494 = vcmask 31744
    %1495 = vst.msk [vmem:[%s6] sm:$0xff] %vm1494, %v1489
  $region33: #{lstm_seq_forward.1} parent=0 // pred_fallthru
    _
  // Predicated region
  $region34: #{lstm_seq_forward.1} parent=0 // pred_check
    _
  $region35: #{lstm_seq_forward.1} parent=0 // pred_check_branch
    %1497 = sbr.rel (0) target = $region37
  $region36: #{lstm_seq_forward.1} parent=0 // pred_region
    _
  $region37: #{lstm_seq_forward.1} parent=0 // pred_fallthru
    _
  // Predicated region
  $region38: #{lstm_seq_forward.1} parent=0 // pred_check
    _
  $region39: #{lstm_seq_forward.1} parent=0 // pred_check_branch
    %1499 = sbr.rel (0) target = $region41
  $region40: #{lstm_seq_forward.1} parent=0 // pred_region
    _
  $region41: #{lstm_seq_forward.1} parent=0 // pred_fallthru
    _

</llo_original>
